<compile_context>
chip_gen: v6e
topology: v6e:2x2x1
jax: 0.10.0
libtpu: 0.0.40
codegen_flags: <defaults>
</compile_context>

<pallas_src>
import functools

import jax
import jax.numpy as jnp
import numpy as np
from jax.experimental import pallas as pl
from jax.experimental.pallas import tpu as pltpu


def _fused_cnn_kernel(x_ref, m_ref, w1_ref, b1_ref, g1_ref, be1_ref,
                      w2_ref, b2_ref, g2_ref, be2_ref, o_ref,
                      *, W, NHW, eps):
  """Fused [conv3x3 + bias + ReLU + BatchNorm2d] x 2 in channels-major layout.

  x_ref:   (Cp, NHW)        input pixels (channel-padded), col = n*H*W + h*W + w
  m_ref:   (9, 1, NHW)      per-tap validity masks (replace halo padding)
  w1_ref:  (C1, 9*Cp)       layer-1 weights, column = tap*Cp + cin
  b1/g1/be1: (C1, 1)        layer-1 conv bias / BN gamma / BN beta
  w2_ref:  (1, C2b, 9*C1)   this block's layer-2 weights, column = tap*C1 + c1
  b2/g2/be2: (1, C2b, 1)    this block's layer-2 bias / gamma / beta
  o_ref:   (C2b, NHW)       lane-dense output block (NHW is a multiple of 128)
  """
  inv_cnt = jnp.float32(1.0 / NHW)

  def conv3x3(x_cm, w_mat):
    # Express the 9 taps as static lane rolls (XLU) + precomputed masks, stack
    # them along sublanes and contract all taps in a single MXU matmul.
    pieces = []
    for dy in range(3):
      for dx in range(3):
        delta = (dy - 1) * W + (dx - 1)
        if delta == 0:
          pieces.append(x_cm)                                  # centre tap
        else:
          xs = pltpu.roll(x_cm, (-delta) % NHW, 1)             # static lane roll
          pieces.append(xs * m_ref[dy * 3 + dx])               # zero halo taps
    stacked = jnp.concatenate(pieces, axis=0)                  # (9*C, NHW)
    return jnp.dot(w_mat, stacked, preferred_element_type=jnp.float32)

  def relu_bn(acc, b, g, be):
    y = jnp.maximum(acc + b, 0.0)                              # conv bias + ReLU
    mean = jnp.sum(y, axis=1, keepdims=True) * inv_cnt         # per-channel stats
    var = jnp.sum(y * y, axis=1, keepdims=True) * inv_cnt - mean * mean
    scale = g * jax.lax.rsqrt(var + eps)                       # BN affine folded
    shift = be - mean * scale                                  # into one FMA
    return y * scale + shift

  # Layer 1 (all C1 channels; cheaply recomputed by every channel-block step so
  # the grid axis stays fully "parallel").
  y1 = relu_bn(conv3x3(x_ref[...], w1_ref[...]),
               b1_ref[...], g1_ref[...], be1_ref[...])
  # Layer 2: this grid step's block of output channels (BN is per-channel, so a
  # channel block is self-contained).
  y2 = relu_bn(conv3x3(y1, w2_ref[0]),
               b2_ref[0], g2_ref[0], be2_ref[0])

  o_ref[...] = y2            # (C2b, N*H*W): full-width unmasked stores


def cnn_base_forward(x_nchw, params, *, eps=1e-5):
  """CNNBase.forward: fused 2-block CNN, then flatten to (N, C*H*W) NCHW order."""
  if len(params) != 2:
    raise NotImplementedError("fused kernel targets the default 2-block CNNBase")
  (w1, b1, g1, be1), (w2, b2, g2, be2) = params
  N, Cin, H, W = x_nchw.shape
  C1, C2 = w1.shape[-1], w2.shape[-1]
  NHW = N * H * W
  f32 = jnp.float32

  # Split layer-2 output channels into `nb` independent blocks (BN stats are
  # per-channel) -> one fully "parallel" grid axis (both v7x TensorCores).
  nb = 2 if (C2 % 2 == 0 and (C2 // 2) % 8 == 0) else 1
  C2b = C2 // nb
  # Pad input channels up to a full f32 sublane tile so tap-stacking is aligned.
  Cp = ((Cin + 7) // 8) * 8

  # Channels-major pixel slab (Cp, N*H*W); column index = n*H*W + h*W + w.
  x_cm = x_nchw.astype(f32).transpose(1, 0, 2, 3).reshape(Cin, NHW)
  x_cm = jnp.pad(x_cm, ((0, Cp - Cin), (0, 0)))

  # Host-precomputed per-tap validity masks (indexed by output column).
  col = np.arange(NHW)
  hh, ww = (col // W) % H, col % W
  masks = np.zeros((9, 1, NHW), np.float32)
  for dy in range(3):
    for dx in range(3):
      ok = ((hh + dy - 1 >= 0) & (hh + dy - 1 < H) &
            (ww + dx - 1 >= 0) & (ww + dx - 1 < W))
      masks[dy * 3 + dx, 0, :] = ok.astype(np.float32)
  masks = jnp.asarray(masks)

  # Weights as (Cout, 9*Cin) matmul operands; column = tap*Cin + cin.
  w1k = jnp.transpose(w1.astype(f32), (3, 0, 1, 2))            # (C1, 3, 3, Cin)
  w1k = jnp.pad(w1k, ((0, 0), (0, 0), (0, 0), (0, Cp - Cin))).reshape(C1, 9 * Cp)
  w2k = jnp.transpose(w2.astype(f32), (3, 0, 1, 2)).reshape(nb, C2b, 9 * C1)
  b1k, g1k, be1k = (v.astype(f32).reshape(C1, 1) for v in (b1, g1, be1))
  b2k, g2k, be2k = (v.astype(f32).reshape(nb, C2b, 1) for v in (b2, g2, be2))

  kernel = functools.partial(_fused_cnn_kernel, W=W, NHW=NHW, eps=eps)
  flops = 2 * NHW * 9 * (nb * Cp * C1 + C1 * C2)
  bytes_acc = 4 * (nb * (Cp * NHW + 9 * NHW + 9 * C1 * Cp + 3 * C1)
                   + 9 * C1 * C2 + 3 * C2 + C2 * NHW)

  out_cm = pl.pallas_call(
      kernel,
      out_shape=jax.ShapeDtypeStruct((C2, NHW), f32),
      grid=(nb,),
      in_specs=[
          pl.BlockSpec((Cp, NHW), lambda j: (0, 0)),               # x (read once)
          pl.BlockSpec((9, 1, NHW), lambda j: (0, 0, 0)),          # tap masks
          pl.BlockSpec((C1, 9 * Cp), lambda j: (0, 0)),            # w1
          pl.BlockSpec((C1, 1), lambda j: (0, 0)),                 # b1
          pl.BlockSpec((C1, 1), lambda j: (0, 0)),                 # gamma1
          pl.BlockSpec((C1, 1), lambda j: (0, 0)),                 # beta1
          pl.BlockSpec((1, C2b, 9 * C1), lambda j: (j, 0, 0)),     # w2 block
          pl.BlockSpec((1, C2b, 1), lambda j: (j, 0, 0)),          # b2 block
          pl.BlockSpec((1, C2b, 1), lambda j: (j, 0, 0)),          # gamma2 block
          pl.BlockSpec((1, C2b, 1), lambda j: (j, 0, 0)),          # beta2 block
      ],
      out_specs=pl.BlockSpec((C2b, NHW), lambda j: (j, 0)),
      compiler_params=pltpu.CompilerParams(
          dimension_semantics=("parallel",),
          vmem_limit_bytes=32 * 1024 * 1024),
      cost_estimate=pl.CostEstimate(flops=flops,
                                    transcendentals=nb * (C1 + C2b),
                                    bytes_accessed=bytes_acc),
  )(x_cm, masks, w1k, b1k, g1k, be1k, w2k, b2k, g2k, be2k)

  # (C2, N*H*W) -> (N, C2*H*W): exactly x.view(N, -1) on the NCHW feature map.
  return out_cm.reshape(C2, N, H * W).transpose(1, 0, 2).reshape(N, C2 * H * W)


def init_params(key, input_channels, cnn_channels):
  """Deterministic parameters matching the PyTorch module's shapes."""
  params = []
  in_ch = input_channels
  for out_ch in cnn_channels:
    key, kw, kb = jax.random.split(key, 3)
    fan_in = in_ch * 3 * 3
    bound = 1.0 / np.sqrt(fan_in)
    w = jax.random.uniform(kw, (3, 3, in_ch, out_ch), jnp.float32, -bound, bound)
    b = jax.random.uniform(kb, (out_ch,), jnp.float32, -bound, bound)
    gamma = jnp.ones((out_ch,), jnp.float32)   # BatchNorm2d default weight
    beta = jnp.zeros((out_ch,), jnp.float32)   # BatchNorm2d default bias
    params.append((w, b, gamma, beta))
    in_ch = out_ch
  return params


def reference_forward(x_nchw, params, eps=1e-5):
  """Pure-JAX reference (lax conv, two-pass BN) for correctness checking."""
  x = x_nchw
  for (w, b, gamma, beta) in params:
    y = jax.lax.conv_general_dilated(
        x, w, window_strides=(1, 1), padding="SAME",
        dimension_numbers=("NCHW", "HWIO", "NCHW"),
        precision=jax.lax.Precision.HIGHEST)
    y = y + b[None, :, None, None]
    y = jnp.maximum(y, 0.0)
    mean = jnp.mean(y, axis=(0, 2, 3), keepdims=True)
    var = jnp.mean((y - mean) ** 2, axis=(0, 2, 3), keepdims=True)
    y = (y - mean) * jax.lax.rsqrt(var + eps)
    y = y * gamma[None, :, None, None] + beta[None, :, None, None]
    x = y
  return x.reshape(x.shape[0], -1)


if __name__ == "__main__":
  batch = 2
  input_channels = 4
  grid_size = 16
  cnn_channels = [32, 64]

  key = jax.random.PRNGKey(0)
  key, kx = jax.random.split(key)
  x = jax.random.normal(kx, (batch, input_channels, grid_size, grid_size),
                        jnp.float32)
  params = init_params(key, input_channels, cnn_channels)

  out = jax.block_until_ready(cnn_base_forward(x, params))

  expected_output_size = cnn_channels[-1] * grid_size * grid_size
  assert out.shape == (batch, expected_output_size), out.shape

  ref = jax.block_until_ready(reference_forward(x, params))
  # Tolerance covers MXU default-precision (bf16-pass) f32 matmuls vs the
  # HIGHEST-precision reference; layout/mask/weight-order bugs would be O(1).
  np.testing.assert_allclose(np.asarray(out), np.asarray(ref),
                             rtol=2e-2, atol=2e-2)

  print("KERNEL_OK")
</pallas_src>

<mosaic_0001>
module attributes {stable_mosaic.version = 11 : i64} {
  func.func @_fused_cnn_kernel(%arg0: i32, %arg1: memref<8x512xf32, #tpu.memory_space<vmem>>, %arg2: memref<9x1x512xf32, #tpu.memory_space<vmem>>, %arg3: memref<32x72xf32, #tpu.memory_space<vmem>>, %arg4: memref<32x1xf32, #tpu.memory_space<vmem>>, %arg5: memref<32x1xf32, #tpu.memory_space<vmem>>, %arg6: memref<32x1xf32, #tpu.memory_space<vmem>>, %arg7: memref<1x32x288xf32, #tpu.memory_space<vmem>>, %arg8: memref<1x32x1xf32, #tpu.memory_space<vmem>>, %arg9: memref<1x32x1xf32, #tpu.memory_space<vmem>>, %arg10: memref<1x32x1xf32, #tpu.memory_space<vmem>>, %arg11: memref<32x512xf32, #tpu.memory_space<vmem>>) attributes {dimension_semantics = [#tpu.dimension_semantics<parallel>], iteration_bounds = array<i64: 2>, scalar_prefetch = 0 : i64, scratch_operands = 0 : i64, tpu.core_type = #tpu.core_type<tc>, window_params = [{pipeline_mode = #tpu.pipeline_mode<synchronous>, transform_indices = @transform_0, window_bounds = array<i64: 8, 512>}, {pipeline_mode = #tpu.pipeline_mode<synchronous>, transform_indices = @transform_1, window_bounds = array<i64: 9, 1, 512>}, {pipeline_mode = #tpu.pipeline_mode<synchronous>, transform_indices = @transform_2, window_bounds = array<i64: 32, 72>}, {pipeline_mode = #tpu.pipeline_mode<synchronous>, transform_indices = @transform_3, window_bounds = array<i64: 32, 1>}, {pipeline_mode = #tpu.pipeline_mode<synchronous>, transform_indices = @transform_4, window_bounds = array<i64: 32, 1>}, {pipeline_mode = #tpu.pipeline_mode<synchronous>, transform_indices = @transform_5, window_bounds = array<i64: 32, 1>}, {transform_indices = @transform_6, window_bounds = array<i64: 1, 32, 288>}, {transform_indices = @transform_7, window_bounds = array<i64: 1, 32, 1>}, {transform_indices = @transform_8, window_bounds = array<i64: 1, 32, 1>}, {transform_indices = @transform_9, window_bounds = array<i64: 1, 32, 1>}, {transform_indices = @transform_10, window_bounds = array<i64: 32, 512>}]} {
    %c0 = arith.constant 0 : index
    %c0_0 = arith.constant 0 : index
    %0 = vector.load %arg1[%c0, %c0_0] : memref<8x512xf32, #tpu.memory_space<vmem>>, vector<8x512xf32>
    %c0_1 = arith.constant 0 : index
    %c0_2 = arith.constant 0 : index
    %1 = vector.load %arg3[%c0_1, %c0_2] : memref<32x72xf32, #tpu.memory_space<vmem>>, vector<32x72xf32>
    %c17_i32 = arith.constant 17 : i32
    %2 = tpu.dynamic_rotate %0 by %c17_i32 dim 1 : vector<8x512xf32>, i32 -> vector<8x512xf32>
    %c0_3 = arith.constant 0 : index
    %c0_4 = arith.constant 0 : index
    %c0_5 = arith.constant 0 : index
    %3 = vector.load %arg2[%c0_3, %c0_4, %c0_5] : memref<9x1x512xf32, #tpu.memory_space<vmem>>, vector<1x1x512xf32>
    %4 = vector.shape_cast %3 : vector<1x1x512xf32> to vector<1x512xf32>
    %5 = vector.broadcast %4 : vector<1x512xf32> to vector<8x512xf32>
    %6 = arith.mulf %2, %5 : vector<8x512xf32>
    %c16_i32 = arith.constant 16 : i32
    %7 = tpu.dynamic_rotate %0 by %c16_i32 dim 1 : vector<8x512xf32>, i32 -> vector<8x512xf32>
    %c1 = arith.constant 1 : index
    %c0_6 = arith.constant 0 : index
    %c0_7 = arith.constant 0 : index
    %8 = vector.load %arg2[%c1, %c0_6, %c0_7] : memref<9x1x512xf32, #tpu.memory_space<vmem>>, vector<1x1x512xf32>
    %9 = vector.shape_cast %8 : vector<1x1x512xf32> to vector<1x512xf32>
    %10 = vector.broadcast %9 : vector<1x512xf32> to vector<8x512xf32>
    %11 = arith.mulf %7, %10 : vector<8x512xf32>
    %c15_i32 = arith.constant 15 : i32
    %12 = tpu.dynamic_rotate %0 by %c15_i32 dim 1 : vector<8x512xf32>, i32 -> vector<8x512xf32>
    %c2 = arith.constant 2 : index
    %c0_8 = arith.constant 0 : index
    %c0_9 = arith.constant 0 : index
    %13 = vector.load %arg2[%c2, %c0_8, %c0_9] : memref<9x1x512xf32, #tpu.memory_space<vmem>>, vector<1x1x512xf32>
    %14 = vector.shape_cast %13 : vector<1x1x512xf32> to vector<1x512xf32>
    %15 = vector.broadcast %14 : vector<1x512xf32> to vector<8x512xf32>
    %16 = arith.mulf %12, %15 : vector<8x512xf32>
    %c1_i32 = arith.constant 1 : i32
    %17 = tpu.dynamic_rotate %0 by %c1_i32 dim 1 : vector<8x512xf32>, i32 -> vector<8x512xf32>
    %c3 = arith.constant 3 : index
    %c0_10 = arith.constant 0 : index
    %c0_11 = arith.constant 0 : index
    %18 = vector.load %arg2[%c3, %c0_10, %c0_11] : memref<9x1x512xf32, #tpu.memory_space<vmem>>, vector<1x1x512xf32>
    %19 = vector.shape_cast %18 : vector<1x1x512xf32> to vector<1x512xf32>
    %20 = vector.broadcast %19 : vector<1x512xf32> to vector<8x512xf32>
    %21 = arith.mulf %17, %20 : vector<8x512xf32>
    %c511_i32 = arith.constant 511 : i32
    %22 = tpu.dynamic_rotate %0 by %c511_i32 dim 1 : vector<8x512xf32>, i32 -> vector<8x512xf32>
    %c5 = arith.constant 5 : index
    %c0_12 = arith.constant 0 : index
    %c0_13 = arith.constant 0 : index
    %23 = vector.load %arg2[%c5, %c0_12, %c0_13] : memref<9x1x512xf32, #tpu.memory_space<vmem>>, vector<1x1x512xf32>
    %24 = vector.shape_cast %23 : vector<1x1x512xf32> to vector<1x512xf32>
    %25 = vector.broadcast %24 : vector<1x512xf32> to vector<8x512xf32>
    %26 = arith.mulf %22, %25 : vector<8x512xf32>
    %c497_i32 = arith.constant 497 : i32
    %27 = tpu.dynamic_rotate %0 by %c497_i32 dim 1 : vector<8x512xf32>, i32 -> vector<8x512xf32>
    %c6 = arith.constant 6 : index
    %c0_14 = arith.constant 0 : index
    %c0_15 = arith.constant 0 : index
    %28 = vector.load %arg2[%c6, %c0_14, %c0_15] : memref<9x1x512xf32, #tpu.memory_space<vmem>>, vector<1x1x512xf32>
    %29 = vector.shape_cast %28 : vector<1x1x512xf32> to vector<1x512xf32>
    %30 = vector.broadcast %29 : vector<1x512xf32> to vector<8x512xf32>
    %31 = arith.mulf %27, %30 : vector<8x512xf32>
    %c496_i32 = arith.constant 496 : i32
    %32 = tpu.dynamic_rotate %0 by %c496_i32 dim 1 : vector<8x512xf32>, i32 -> vector<8x512xf32>
    %c7 = arith.constant 7 : index
    %c0_16 = arith.constant 0 : index
    %c0_17 = arith.constant 0 : index
    %33 = vector.load %arg2[%c7, %c0_16, %c0_17] : memref<9x1x512xf32, #tpu.memory_space<vmem>>, vector<1x1x512xf32>
    %34 = vector.shape_cast %33 : vector<1x1x512xf32> to vector<1x512xf32>
    %35 = vector.broadcast %34 : vector<1x512xf32> to vector<8x512xf32>
    %36 = arith.mulf %32, %35 : vector<8x512xf32>
    %c495_i32 = arith.constant 495 : i32
    %37 = tpu.dynamic_rotate %0 by %c495_i32 dim 1 : vector<8x512xf32>, i32 -> vector<8x512xf32>
    %c8 = arith.constant 8 : index
    %c0_18 = arith.constant 0 : index
    %c0_19 = arith.constant 0 : index
    %38 = vector.load %arg2[%c8, %c0_18, %c0_19] : memref<9x1x512xf32, #tpu.memory_space<vmem>>, vector<1x1x512xf32>
    %39 = vector.shape_cast %38 : vector<1x1x512xf32> to vector<1x512xf32>
    %40 = vector.broadcast %39 : vector<1x512xf32> to vector<8x512xf32>
    %41 = arith.mulf %37, %40 : vector<8x512xf32>
    %42 = tpu.concatenate %6, %11, %16, %21, %0, %26, %31, %36, %41 in 0 : vector<8x512xf32>, vector<8x512xf32>, vector<8x512xf32>, vector<8x512xf32>, vector<8x512xf32>, vector<8x512xf32>, vector<8x512xf32>, vector<8x512xf32>, vector<8x512xf32> -> vector<72x512xf32>
    %cst = arith.constant dense<0.000000e+00> : vector<32x512xf32>
    %43 = tpu.matmul %1, %42, %cst {dimension_numbers = #tpu.dot_dimension_numbers<[1], [0], [0], [1], [0, 0, 1, 1], [], []>} : vector<32x72xf32>, vector<72x512xf32>, vector<32x512xf32> -> vector<32x512xf32>
    %c0_20 = arith.constant 0 : index
    %c0_21 = arith.constant 0 : index
    %44 = vector.load %arg4[%c0_20, %c0_21] : memref<32x1xf32, #tpu.memory_space<vmem>>, vector<32x1xf32>
    %c0_22 = arith.constant 0 : index
    %c0_23 = arith.constant 0 : index
    %45 = vector.load %arg5[%c0_22, %c0_23] : memref<32x1xf32, #tpu.memory_space<vmem>>, vector<32x1xf32>
    %c0_24 = arith.constant 0 : index
    %c0_25 = arith.constant 0 : index
    %46 = vector.load %arg6[%c0_24, %c0_25] : memref<32x1xf32, #tpu.memory_space<vmem>>, vector<32x1xf32>
    %47 = vector.broadcast %44 : vector<32x1xf32> to vector<32x512xf32>
    %48 = arith.addf %43, %47 : vector<32x512xf32>
    %cst_26 = arith.constant 0.000000e+00 : f32
    %49 = vector.broadcast %cst_26 : f32 to vector<32x512xf32>
    %50 = arith.maximumf %48, %49 : vector<32x512xf32>
    %cst_27 = arith.constant dense<0.000000e+00> : vector<32xf32>
    %51 = vector.multi_reduction <add>, %50, %cst_27 [1] : vector<32x512xf32> to vector<32xf32>
    %52 = vector.shape_cast %51 : vector<32xf32> to vector<32x1xf32>
    %cst_28 = arith.constant 0.001953125 : f32
    %53 = vector.broadcast %cst_28 : f32 to vector<32x1xf32>
    %54 = arith.mulf %52, %53 : vector<32x1xf32>
    %55 = arith.mulf %50, %50 : vector<32x512xf32>
    %cst_29 = arith.constant dense<0.000000e+00> : vector<32xf32>
    %56 = vector.multi_reduction <add>, %55, %cst_29 [1] : vector<32x512xf32> to vector<32xf32>
    %57 = vector.shape_cast %56 : vector<32xf32> to vector<32x1xf32>
    %cst_30 = arith.constant 0.001953125 : f32
    %58 = vector.broadcast %cst_30 : f32 to vector<32x1xf32>
    %59 = arith.mulf %57, %58 : vector<32x1xf32>
    %60 = arith.mulf %54, %54 : vector<32x1xf32>
    %61 = arith.subf %59, %60 : vector<32x1xf32>
    %cst_31 = arith.constant 9.99999974E-6 : f32
    %62 = vector.broadcast %cst_31 : f32 to vector<32x1xf32>
    %63 = arith.addf %61, %62 : vector<32x1xf32>
    %64 = math.rsqrt %63 : vector<32x1xf32>
    %65 = arith.mulf %45, %64 : vector<32x1xf32>
    %66 = arith.mulf %54, %65 : vector<32x1xf32>
    %67 = arith.subf %46, %66 : vector<32x1xf32>
    %68 = vector.broadcast %65 : vector<32x1xf32> to vector<32x512xf32>
    %69 = arith.mulf %50, %68 : vector<32x512xf32>
    %70 = vector.broadcast %67 : vector<32x1xf32> to vector<32x512xf32>
    %71 = arith.addf %69, %70 : vector<32x512xf32>
    %c0_32 = arith.constant 0 : index
    %c0_33 = arith.constant 0 : index
    %c0_34 = arith.constant 0 : index
    %72 = vector.load %arg7[%c0_32, %c0_33, %c0_34] : memref<1x32x288xf32, #tpu.memory_space<vmem>>, vector<1x32x288xf32>
    %73 = vector.shape_cast %72 : vector<1x32x288xf32> to vector<32x288xf32>
    %c17_i32_35 = arith.constant 17 : i32
    %74 = tpu.dynamic_rotate %71 by %c17_i32_35 dim 1 : vector<32x512xf32>, i32 -> vector<32x512xf32>
    %c0_36 = arith.constant 0 : index
    %c0_37 = arith.constant 0 : index
    %c0_38 = arith.constant 0 : index
    %75 = vector.load %arg2[%c0_36, %c0_37, %c0_38] : memref<9x1x512xf32, #tpu.memory_space<vmem>>, vector<1x1x512xf32>
    %76 = vector.shape_cast %75 : vector<1x1x512xf32> to vector<1x512xf32>
    %77 = vector.broadcast %76 : vector<1x512xf32> to vector<32x512xf32>
    %78 = arith.mulf %74, %77 : vector<32x512xf32>
    %c16_i32_39 = arith.constant 16 : i32
    %79 = tpu.dynamic_rotate %71 by %c16_i32_39 dim 1 : vector<32x512xf32>, i32 -> vector<32x512xf32>
    %c1_40 = arith.constant 1 : index
    %c0_41 = arith.constant 0 : index
    %c0_42 = arith.constant 0 : index
    %80 = vector.load %arg2[%c1_40, %c0_41, %c0_42] : memref<9x1x512xf32, #tpu.memory_space<vmem>>, vector<1x1x512xf32>
    %81 = vector.shape_cast %80 : vector<1x1x512xf32> to vector<1x512xf32>
    %82 = vector.broadcast %81 : vector<1x512xf32> to vector<32x512xf32>
    %83 = arith.mulf %79, %82 : vector<32x512xf32>
    %c15_i32_43 = arith.constant 15 : i32
    %84 = tpu.dynamic_rotate %71 by %c15_i32_43 dim 1 : vector<32x512xf32>, i32 -> vector<32x512xf32>
    %c2_44 = arith.constant 2 : index
    %c0_45 = arith.constant 0 : index
    %c0_46 = arith.constant 0 : index
    %85 = vector.load %arg2[%c2_44, %c0_45, %c0_46] : memref<9x1x512xf32, #tpu.memory_space<vmem>>, vector<1x1x512xf32>
    %86 = vector.shape_cast %85 : vector<1x1x512xf32> to vector<1x512xf32>
    %87 = vector.broadcast %86 : vector<1x512xf32> to vector<32x512xf32>
    %88 = arith.mulf %84, %87 : vector<32x512xf32>
    %c1_i32_47 = arith.constant 1 : i32
    %89 = tpu.dynamic_rotate %71 by %c1_i32_47 dim 1 : vector<32x512xf32>, i32 -> vector<32x512xf32>
    %c3_48 = arith.constant 3 : index
    %c0_49 = arith.constant 0 : index
    %c0_50 = arith.constant 0 : index
    %90 = vector.load %arg2[%c3_48, %c0_49, %c0_50] : memref<9x1x512xf32, #tpu.memory_space<vmem>>, vector<1x1x512xf32>
    %91 = vector.shape_cast %90 : vector<1x1x512xf32> to vector<1x512xf32>
    %92 = vector.broadcast %91 : vector<1x512xf32> to vector<32x512xf32>
    %93 = arith.mulf %89, %92 : vector<32x512xf32>
    %c511_i32_51 = arith.constant 511 : i32
    %94 = tpu.dynamic_rotate %71 by %c511_i32_51 dim 1 : vector<32x512xf32>, i32 -> vector<32x512xf32>
    %c5_52 = arith.constant 5 : index
    %c0_53 = arith.constant 0 : index
    %c0_54 = arith.constant 0 : index
    %95 = vector.load %arg2[%c5_52, %c0_53, %c0_54] : memref<9x1x512xf32, #tpu.memory_space<vmem>>, vector<1x1x512xf32>
    %96 = vector.shape_cast %95 : vector<1x1x512xf32> to vector<1x512xf32>
    %97 = vector.broadcast %96 : vector<1x512xf32> to vector<32x512xf32>
    %98 = arith.mulf %94, %97 : vector<32x512xf32>
    %c497_i32_55 = arith.constant 497 : i32
    %99 = tpu.dynamic_rotate %71 by %c497_i32_55 dim 1 : vector<32x512xf32>, i32 -> vector<32x512xf32>
    %c6_56 = arith.constant 6 : index
    %c0_57 = arith.constant 0 : index
    %c0_58 = arith.constant 0 : index
    %100 = vector.load %arg2[%c6_56, %c0_57, %c0_58] : memref<9x1x512xf32, #tpu.memory_space<vmem>>, vector<1x1x512xf32>
    %101 = vector.shape_cast %100 : vector<1x1x512xf32> to vector<1x512xf32>
    %102 = vector.broadcast %101 : vector<1x512xf32> to vector<32x512xf32>
    %103 = arith.mulf %99, %102 : vector<32x512xf32>
    %c496_i32_59 = arith.constant 496 : i32
    %104 = tpu.dynamic_rotate %71 by %c496_i32_59 dim 1 : vector<32x512xf32>, i32 -> vector<32x512xf32>
    %c7_60 = arith.constant 7 : index
    %c0_61 = arith.constant 0 : index
    %c0_62 = arith.constant 0 : index
    %105 = vector.load %arg2[%c7_60, %c0_61, %c0_62] : memref<9x1x512xf32, #tpu.memory_space<vmem>>, vector<1x1x512xf32>
    %106 = vector.shape_cast %105 : vector<1x1x512xf32> to vector<1x512xf32>
    %107 = vector.broadcast %106 : vector<1x512xf32> to vector<32x512xf32>
    %108 = arith.mulf %104, %107 : vector<32x512xf32>
    %c495_i32_63 = arith.constant 495 : i32
    %109 = tpu.dynamic_rotate %71 by %c495_i32_63 dim 1 : vector<32x512xf32>, i32 -> vector<32x512xf32>
    %c8_64 = arith.constant 8 : index
    %c0_65 = arith.constant 0 : index
    %c0_66 = arith.constant 0 : index
    %110 = vector.load %arg2[%c8_64, %c0_65, %c0_66] : memref<9x1x512xf32, #tpu.memory_space<vmem>>, vector<1x1x512xf32>
    %111 = vector.shape_cast %110 : vector<1x1x512xf32> to vector<1x512xf32>
    %112 = vector.broadcast %111 : vector<1x512xf32> to vector<32x512xf32>
    %113 = arith.mulf %109, %112 : vector<32x512xf32>
    %114 = tpu.concatenate %78, %83, %88, %93, %71, %98, %103, %108, %113 in 0 : vector<32x512xf32>, vector<32x512xf32>, vector<32x512xf32>, vector<32x512xf32>, vector<32x512xf32>, vector<32x512xf32>, vector<32x512xf32>, vector<32x512xf32>, vector<32x512xf32> -> vector<288x512xf32>
    %cst_67 = arith.constant dense<0.000000e+00> : vector<32x512xf32>
    %115 = tpu.matmul %73, %114, %cst_67 {dimension_numbers = #tpu.dot_dimension_numbers<[1], [0], [0], [1], [0, 0, 1, 1], [], []>} : vector<32x288xf32>, vector<288x512xf32>, vector<32x512xf32> -> vector<32x512xf32>
    %c0_68 = arith.constant 0 : index
    %c0_69 = arith.constant 0 : index
    %c0_70 = arith.constant 0 : index
    %116 = vector.load %arg8[%c0_68, %c0_69, %c0_70] : memref<1x32x1xf32, #tpu.memory_space<vmem>>, vector<1x32x1xf32>
    %117 = vector.shape_cast %116 : vector<1x32x1xf32> to vector<32x1xf32>
    %c0_71 = arith.constant 0 : index
    %c0_72 = arith.constant 0 : index
    %c0_73 = arith.constant 0 : index
    %118 = vector.load %arg9[%c0_71, %c0_72, %c0_73] : memref<1x32x1xf32, #tpu.memory_space<vmem>>, vector<1x32x1xf32>
    %119 = vector.shape_cast %118 : vector<1x32x1xf32> to vector<32x1xf32>
    %c0_74 = arith.constant 0 : index
    %c0_75 = arith.constant 0 : index
    %c0_76 = arith.constant 0 : index
    %120 = vector.load %arg10[%c0_74, %c0_75, %c0_76] : memref<1x32x1xf32, #tpu.memory_space<vmem>>, vector<1x32x1xf32>
    %121 = vector.shape_cast %120 : vector<1x32x1xf32> to vector<32x1xf32>
    %122 = vector.broadcast %117 : vector<32x1xf32> to vector<32x512xf32>
    %123 = arith.addf %115, %122 : vector<32x512xf32>
    %cst_77 = arith.constant 0.000000e+00 : f32
    %124 = vector.broadcast %cst_77 : f32 to vector<32x512xf32>
    %125 = arith.maximumf %123, %124 : vector<32x512xf32>
    %cst_78 = arith.constant dense<0.000000e+00> : vector<32xf32>
    %126 = vector.multi_reduction <add>, %125, %cst_78 [1] : vector<32x512xf32> to vector<32xf32>
    %127 = vector.shape_cast %126 : vector<32xf32> to vector<32x1xf32>
    %cst_79 = arith.constant 0.001953125 : f32
    %128 = vector.broadcast %cst_79 : f32 to vector<32x1xf32>
    %129 = arith.mulf %127, %128 : vector<32x1xf32>
    %130 = arith.mulf %125, %125 : vector<32x512xf32>
    %cst_80 = arith.constant dense<0.000000e+00> : vector<32xf32>
    %131 = vector.multi_reduction <add>, %130, %cst_80 [1] : vector<32x512xf32> to vector<32xf32>
    %132 = vector.shape_cast %131 : vector<32xf32> to vector<32x1xf32>
    %cst_81 = arith.constant 0.001953125 : f32
    %133 = vector.broadcast %cst_81 : f32 to vector<32x1xf32>
    %134 = arith.mulf %132, %133 : vector<32x1xf32>
    %135 = arith.mulf %129, %129 : vector<32x1xf32>
    %136 = arith.subf %134, %135 : vector<32x1xf32>
    %cst_82 = arith.constant 9.99999974E-6 : f32
    %137 = vector.broadcast %cst_82 : f32 to vector<32x1xf32>
    %138 = arith.addf %136, %137 : vector<32x1xf32>
    %139 = math.rsqrt %138 : vector<32x1xf32>
    %140 = arith.mulf %119, %139 : vector<32x1xf32>
    %141 = arith.mulf %129, %140 : vector<32x1xf32>
    %142 = arith.subf %121, %141 : vector<32x1xf32>
    %143 = vector.broadcast %140 : vector<32x1xf32> to vector<32x512xf32>
    %144 = arith.mulf %125, %143 : vector<32x512xf32>
    %145 = vector.broadcast %142 : vector<32x1xf32> to vector<32x512xf32>
    %146 = arith.addf %144, %145 : vector<32x512xf32>
    %c0_83 = arith.constant 0 : index
    %c0_84 = arith.constant 0 : index
    %147 = vector.load %arg11[%c0_83, %c0_84] : memref<32x512xf32, #tpu.memory_space<vmem>>, vector<32x512xf32>
    tpu.vector_store %arg11[%c0_83, %c0_84], %146 {strides = array<i32>} : memref<32x512xf32, #tpu.memory_space<vmem>>, vector<32x512xf32>,
    return
  }
  func.func @transform_0(%arg0: i32) -> (i32, i32) {
    %c0_i32 = arith.constant 0 : i32
    %c0_i32_0 = arith.constant 0 : i32
    %c0_i32_1 = arith.constant 0 : i32
    return %c0_i32, %c0_i32_0 : i32, i32
  }
  func.func @transform_1(%arg0: i32) -> (i32, i32, i32) {
    %c0_i32 = arith.constant 0 : i32
    %c0_i32_0 = arith.constant 0 : i32
    %c0_i32_1 = arith.constant 0 : i32
    %c0_i32_2 = arith.constant 0 : i32
    return %c0_i32, %c0_i32_0, %c0_i32_1 : i32, i32, i32
  }
  func.func @transform_2(%arg0: i32) -> (i32, i32) {
    %c0_i32 = arith.constant 0 : i32
    %c0_i32_0 = arith.constant 0 : i32
    %c0_i32_1 = arith.constant 0 : i32
    return %c0_i32, %c0_i32_0 : i32, i32
  }
  func.func @transform_3(%arg0: i32) -> (i32, i32) {
    %c0_i32 = arith.constant 0 : i32
    %c0_i32_0 = arith.constant 0 : i32
    %c0_i32_1 = arith.constant 0 : i32
    return %c0_i32, %c0_i32_0 : i32, i32
  }
  func.func @transform_4(%arg0: i32) -> (i32, i32) {
    %c0_i32 = arith.constant 0 : i32
    %c0_i32_0 = arith.constant 0 : i32
    %c0_i32_1 = arith.constant 0 : i32
    return %c0_i32, %c0_i32_0 : i32, i32
  }
  func.func @transform_5(%arg0: i32) -> (i32, i32) {
    %c0_i32 = arith.constant 0 : i32
    %c0_i32_0 = arith.constant 0 : i32
    %c0_i32_1 = arith.constant 0 : i32
    return %c0_i32, %c0_i32_0 : i32, i32
  }
  func.func @transform_6(%arg0: i32) -> (i32, i32, i32) {
    %c0_i32 = arith.constant 0 : i32
    %c0_i32_0 = arith.constant 0 : i32
    %c0_i32_1 = arith.constant 0 : i32
    return %arg0, %c0_i32, %c0_i32_0 : i32, i32, i32
  }
  func.func @transform_7(%arg0: i32) -> (i32, i32, i32) {
    %c0_i32 = arith.constant 0 : i32
    %c0_i32_0 = arith.constant 0 : i32
    %c0_i32_1 = arith.constant 0 : i32
    return %arg0, %c0_i32, %c0_i32_0 : i32, i32, i32
  }
  func.func @transform_8(%arg0: i32) -> (i32, i32, i32) {
    %c0_i32 = arith.constant 0 : i32
    %c0_i32_0 = arith.constant 0 : i32
    %c0_i32_1 = arith.constant 0 : i32
    return %arg0, %c0_i32, %c0_i32_0 : i32, i32, i32
  }
  func.func @transform_9(%arg0: i32) -> (i32, i32, i32) {
    %c0_i32 = arith.constant 0 : i32
    %c0_i32_0 = arith.constant 0 : i32
    %c0_i32_1 = arith.constant 0 : i32
    return %arg0, %c0_i32, %c0_i32_0 : i32, i32, i32
  }
  func.func @transform_10(%arg0: i32) -> (i32, i32) {
    %c0_i32 = arith.constant 0 : i32
    %c0_i32_0 = arith.constant 0 : i32
    return %arg0, %c0_i32 : i32, i32
  }
}

</mosaic_0001>

<llo_original>
// kernel: tpu_custom_call.1
$region0: #{tpu_custom_call.1}
  #allocation0 [shape = 'u32[]', space=smem, size = 0x4, offset = 0x4, fixed_abs, tag = 'smem constant byte address 0x4 - core index']
  #allocation1 [shape = 'u32[144,128]{1,0:T(1,128)}', space=vmem, size = 0x12000, scoped, tag = 'internal scratch']
  %s0 = inlined_call_operand.vmem [shape: f32[8,512], index: 0, kind: input, shape index: {}]
  %s1 = inlined_call_operand.vmem [shape: f32[9,1,512], index: 1, kind: input, shape index: {}]
  %s2 = inlined_call_operand.vmem [shape: f32[32,72], index: 2, kind: input, shape index: {}]
  %s3 = inlined_call_operand.vmem [shape: f32[32,1], index: 3, kind: input, shape index: {}]
  %s4 = inlined_call_operand.vmem [shape: f32[32,1], index: 4, kind: input, shape index: {}]
  %s5 = inlined_call_operand.vmem [shape: f32[32,1], index: 5, kind: input, shape index: {}]
  %s6 = inlined_call_operand.vmem [shape: f32[2,32,288], index: 6, kind: input, shape index: {}]
  %s7 = inlined_call_operand.vmem [shape: f32[2,32,1], index: 7, kind: input, shape index: {}]
  %s8 = inlined_call_operand.vmem [shape: f32[2,32,1], index: 8, kind: input, shape index: {}]
  %s9 = inlined_call_operand.vmem [shape: f32[2,32,1], index: 9, kind: input, shape index: {}]
  %s10 = inlined_call_operand.hbm [shape: f32[64,512], index: 10, kind: output, shape index: {}]
  %s11 = sld [smem:[#allocation0]]
  $region73: #{tpu_custom_call.1} parent=0
    _
  %s13 = ssub.s32 1, %s11
  %s14 = scalar_select 0, %s13, %s11
  $region1: #{tpu_custom_call.1} parent=0
    #allocation2 [shape = 'u8[131072]{0}', space=vmem, size = 0x20000, scoped, tag = 'output window, operand 0']
    #allocation3 [shape = 's32[2]{0}', space=sflag, size = 0x8, scoped, tag = 'scoped memory for tpu_custom_call.1']
    %15 = vsyncpa [#allocation3], 0
    %s16 = scalar_lea.sflag [#allocation3], 1
    %17 = vsyncpa %s16, 0
    loop: start=0, step=1, limit=4
    $region2: #{tpu_custom_call.1} parent=1 // loop_pre_header
      _
    $region3: #{tpu_custom_call.1} parent=1 // loop_header
      %s19 = sphi 0, %s23
      %p20 = scmp.ge.s32.totalorder %s19, 4
      %s27 = sphi 0, %s27
      %s29 = sphi 0, %s27
      %s30 = sphi 0, %s29
      %s44 = sphi 0, %s30
      %s48 = sphi 0, %s48
      %s50 = sphi 0, %s48
      %s51 = sphi 0, %s50
      %s65 = sphi 0, %s51
      %s69 = sphi 0, %s69
      %s71 = sphi 0, %s69
      %s72 = sphi 0, %s71
      %s86 = sphi 0, %s72
      %s90 = sphi 0, %s90
      %s92 = sphi 0, %s90
      %s93 = sphi 0, %s92
      %s107 = sphi 0, %s93
      %s111 = sphi 0, %s111
      %s113 = sphi 0, %s111
      %s114 = sphi 0, %s113
      %s128 = sphi 0, %s114
      %s132 = sphi 0, %s132
      %s134 = sphi 0, %s132
      %s135 = sphi 0, %s134
      %s149 = sphi 0, %s135
      %s155 = sphi 0, %s157
      %s158 = sphi 0, %s155
      %s159 = sphi 0, %s158
      %s175 = sphi 0, %s159
      %s181 = sphi 0, %s183
      %s184 = sphi 0, %s181
      %s185 = sphi 0, %s184
      %s201 = sphi 0, %s185
      %s207 = sphi 0, %s209
      %s210 = sphi 0, %s207
      %s211 = sphi 0, %s210
      %s227 = sphi 0, %s211
      %s233 = sphi 0, %s235
      %s236 = sphi 0, %s233
      %s237 = sphi 0, %s236
      %s253 = sphi 0, %s237
      %s259 = sphi 0, %s261
      %s262 = sphi 0, %s259
      %s263 = sphi 0, %s262
      %s279 = sphi 0, %s263
    $region4: #{tpu_custom_call.1} parent=1 // loop_header_branch
      %22 = sbr.rel (%p20) target = $region8
    $region5: #{tpu_custom_call.1} parent=1 // loop_body
      %s24 = ssub.s32 %s19, 1
      %s25 = ssub.s32 %s19, 2
      %s26 = sadd.s32 %s19, 1
      %s28 = sadd.s32 %s27, 1
      %p31 = scmp.eq.s32.totalorder %s19, 1
      %p32 = scmp.ne.s32.totalorder %s27, %s29
      %p33 = scmp.eq.s32.totalorder %s19, 0
      %p34 = por %p32, %p33
      %p35 = scmp.ne.s32.totalorder %s27, %s29
      %p36 = scmp.eq.s32.totalorder %s24, 1
      %p37 = por %p35, %p36
      %p38 = scmp.ne.s32.totalorder %s29, %s30
      %p39 = scmp.eq.s32.totalorder %s24, 0
      %p40 = por %p38, %p39
      %p41 = scmp.ne.s32.totalorder %s29, %s30
      %p42 = scmp.eq.s32.totalorder %s25, 1
      %p43 = por %p41, %p42
      %p45 = scmp.ne.s32.totalorder %s30, %s44
      %p46 = scmp.eq.s32.totalorder %s25, 0
      %p47 = por %p45, %p46
      %s49 = sadd.s32 %s48, 1
      %p52 = scmp.eq.s32.totalorder %s19, 1
      %p53 = scmp.ne.s32.totalorder %s48, %s50
      %p54 = scmp.eq.s32.totalorder %s19, 0
      %p55 = por %p53, %p54
      %p56 = scmp.ne.s32.totalorder %s48, %s50
      %p57 = scmp.eq.s32.totalorder %s24, 1
      %p58 = por %p56, %p57
      %p59 = scmp.ne.s32.totalorder %s50, %s51
      %p60 = scmp.eq.s32.totalorder %s24, 0
      %p61 = por %p59, %p60
      %p62 = scmp.ne.s32.totalorder %s50, %s51
      %p63 = scmp.eq.s32.totalorder %s25, 1
      %p64 = por %p62, %p63
      %p66 = scmp.ne.s32.totalorder %s51, %s65
      %p67 = scmp.eq.s32.totalorder %s25, 0
      %p68 = por %p66, %p67
      %s70 = sadd.s32 %s69, 1
      %p73 = scmp.eq.s32.totalorder %s19, 1
      %p74 = scmp.ne.s32.totalorder %s69, %s71
      %p75 = scmp.eq.s32.totalorder %s19, 0
      %p76 = por %p74, %p75
      %p77 = scmp.ne.s32.totalorder %s69, %s71
      %p78 = scmp.eq.s32.totalorder %s24, 1
      %p79 = por %p77, %p78
      %p80 = scmp.ne.s32.totalorder %s71, %s72
      %p81 = scmp.eq.s32.totalorder %s24, 0
      %p82 = por %p80, %p81
      %p83 = scmp.ne.s32.totalorder %s71, %s72
      %p84 = scmp.eq.s32.totalorder %s25, 1
      %p85 = por %p83, %p84
      %p87 = scmp.ne.s32.totalorder %s72, %s86
      %p88 = scmp.eq.s32.totalorder %s25, 0
      %p89 = por %p87, %p88
      %s91 = sadd.s32 %s90, 1
      %p94 = scmp.eq.s32.totalorder %s19, 1
      %p95 = scmp.ne.s32.totalorder %s90, %s92
      %p96 = scmp.eq.s32.totalorder %s19, 0
      %p97 = por %p95, %p96
      %p98 = scmp.ne.s32.totalorder %s90, %s92
      %p99 = scmp.eq.s32.totalorder %s24, 1
      %p100 = por %p98, %p99
      %p101 = scmp.ne.s32.totalorder %s92, %s93
      %p102 = scmp.eq.s32.totalorder %s24, 0
      %p103 = por %p101, %p102
      %p104 = scmp.ne.s32.totalorder %s92, %s93
      %p105 = scmp.eq.s32.totalorder %s25, 1
      %p106 = por %p104, %p105
      %p108 = scmp.ne.s32.totalorder %s93, %s107
      %p109 = scmp.eq.s32.totalorder %s25, 0
      %p110 = por %p108, %p109
      %s112 = sadd.s32 %s111, 1
      %p115 = scmp.eq.s32.totalorder %s19, 1
      %p116 = scmp.ne.s32.totalorder %s111, %s113
      %p117 = scmp.eq.s32.totalorder %s19, 0
      %p118 = por %p116, %p117
      %p119 = scmp.ne.s32.totalorder %s111, %s113
      %p120 = scmp.eq.s32.totalorder %s24, 1
      %p121 = por %p119, %p120
      %p122 = scmp.ne.s32.totalorder %s113, %s114
      %p123 = scmp.eq.s32.totalorder %s24, 0
      %p124 = por %p122, %p123
      %p125 = scmp.ne.s32.totalorder %s113, %s114
      %p126 = scmp.eq.s32.totalorder %s25, 1
      %p127 = por %p125, %p126
      %p129 = scmp.ne.s32.totalorder %s114, %s128
      %p130 = scmp.eq.s32.totalorder %s25, 0
      %p131 = por %p129, %p130
      %s133 = sadd.s32 %s132, 1
      %p136 = scmp.eq.s32.totalorder %s19, 1
      %p137 = scmp.ne.s32.totalorder %s132, %s134
      %p138 = scmp.eq.s32.totalorder %s19, 0
      %p139 = por %p137, %p138
      %p140 = scmp.ne.s32.totalorder %s132, %s134
      %p141 = scmp.eq.s32.totalorder %s24, 1
      %p142 = por %p140, %p141
      %p143 = scmp.ne.s32.totalorder %s134, %s135
      %p144 = scmp.eq.s32.totalorder %s24, 0
      %p145 = por %p143, %p144
      %p146 = scmp.ne.s32.totalorder %s134, %s135
      %p147 = scmp.eq.s32.totalorder %s25, 1
      %p148 = por %p146, %p147
      %p150 = scmp.ne.s32.totalorder %s135, %s149
      %p151 = scmp.eq.s32.totalorder %s25, 0
      %p152 = por %p150, %p151
      %s153 = ssub.s32 %s19, %s26
      %p154 = scmp.eq.s32.totalorder %s153, 0
      %s156 = sadd.s32 %s155, 1
      %s157 = scalar_select %p154, %s155, %s156
      %p160 = pneg %p154
      %p161 = scmp.eq.s32.totalorder %s19, 1
      %p162 = por %p160, %p161
      %p163 = scmp.ne.s32.totalorder %s155, %s158
      %p164 = scmp.eq.s32.totalorder %s19, 0
      %p165 = por %p163, %p164
      %p166 = scmp.ne.s32.totalorder %s155, %s158
      %p167 = scmp.eq.s32.totalorder %s24, 1
      %p168 = por %p166, %p167
      %p169 = scmp.ne.s32.totalorder %s158, %s159
      %p170 = scmp.eq.s32.totalorder %s24, 0
      %p171 = por %p169, %p170
      %p172 = scmp.ne.s32.totalorder %s158, %s159
      %p173 = scmp.eq.s32.totalorder %s25, 1
      %p174 = por %p172, %p173
      %p176 = scmp.ne.s32.totalorder %s159, %s175
      %p177 = scmp.eq.s32.totalorder %s25, 0
      %p178 = por %p176, %p177
      %s179 = ssub.s32 %s19, %s26
      %p180 = scmp.eq.s32.totalorder %s179, 0
      %s182 = sadd.s32 %s181, 1
      %s183 = scalar_select %p180, %s181, %s182
      %p186 = pneg %p180
      %p187 = scmp.eq.s32.totalorder %s19, 1
      %p188 = por %p186, %p187
      %p189 = scmp.ne.s32.totalorder %s181, %s184
      %p190 = scmp.eq.s32.totalorder %s19, 0
      %p191 = por %p189, %p190
      %p192 = scmp.ne.s32.totalorder %s181, %s184
      %p193 = scmp.eq.s32.totalorder %s24, 1
      %p194 = por %p192, %p193
      %p195 = scmp.ne.s32.totalorder %s184, %s185
      %p196 = scmp.eq.s32.totalorder %s24, 0
      %p197 = por %p195, %p196
      %p198 = scmp.ne.s32.totalorder %s184, %s185
      %p199 = scmp.eq.s32.totalorder %s25, 1
      %p200 = por %p198, %p199
      %p202 = scmp.ne.s32.totalorder %s185, %s201
      %p203 = scmp.eq.s32.totalorder %s25, 0
      %p204 = por %p202, %p203
      %s205 = ssub.s32 %s19, %s26
      %p206 = scmp.eq.s32.totalorder %s205, 0
      %s208 = sadd.s32 %s207, 1
      %s209 = scalar_select %p206, %s207, %s208
      %p212 = pneg %p206
      %p213 = scmp.eq.s32.totalorder %s19, 1
      %p214 = por %p212, %p213
      %p215 = scmp.ne.s32.totalorder %s207, %s210
      %p216 = scmp.eq.s32.totalorder %s19, 0
      %p217 = por %p215, %p216
      %p218 = scmp.ne.s32.totalorder %s207, %s210
      %p219 = scmp.eq.s32.totalorder %s24, 1
      %p220 = por %p218, %p219
      %p221 = scmp.ne.s32.totalorder %s210, %s211
      %p222 = scmp.eq.s32.totalorder %s24, 0
      %p223 = por %p221, %p222
      %p224 = scmp.ne.s32.totalorder %s210, %s211
      %p225 = scmp.eq.s32.totalorder %s25, 1
      %p226 = por %p224, %p225
      %p228 = scmp.ne.s32.totalorder %s211, %s227
      %p229 = scmp.eq.s32.totalorder %s25, 0
      %p230 = por %p228, %p229
      %s231 = ssub.s32 %s19, %s26
      %p232 = scmp.eq.s32.totalorder %s231, 0
      %s234 = sadd.s32 %s233, 1
      %s235 = scalar_select %p232, %s233, %s234
      %p238 = pneg %p232
      %p239 = scmp.eq.s32.totalorder %s19, 1
      %p240 = por %p238, %p239
      %p241 = scmp.ne.s32.totalorder %s233, %s236
      %p242 = scmp.eq.s32.totalorder %s19, 0
      %p243 = por %p241, %p242
      %p244 = scmp.ne.s32.totalorder %s233, %s236
      %p245 = scmp.eq.s32.totalorder %s24, 1
      %p246 = por %p244, %p245
      %p247 = scmp.ne.s32.totalorder %s236, %s237
      %p248 = scmp.eq.s32.totalorder %s24, 0
      %p249 = por %p247, %p248
      %p250 = scmp.ne.s32.totalorder %s236, %s237
      %p251 = scmp.eq.s32.totalorder %s25, 1
      %p252 = por %p250, %p251
      %p254 = scmp.ne.s32.totalorder %s237, %s253
      %p255 = scmp.eq.s32.totalorder %s25, 0
      %p256 = por %p254, %p255
      %s257 = ssub.s32 %s19, %s26
      %p258 = scmp.eq.s32.totalorder %s257, 0
      %s260 = sadd.s32 %s259, 1
      %s261 = scalar_select %p258, %s259, %s260
      %p264 = pneg %p258
      %p265 = scmp.eq.s32.totalorder %s19, 1
      %p266 = por %p264, %p265
      %p267 = scmp.ne.s32.totalorder %s259, %s262
      %p268 = scmp.eq.s32.totalorder %s19, 0
      %p269 = por %p267, %p268
      %p270 = scmp.ne.s32.totalorder %s259, %s262
      %p271 = scmp.eq.s32.totalorder %s24, 1
      %p272 = por %p270, %p271
      %p273 = scmp.ne.s32.totalorder %s262, %s263
      %p274 = scmp.eq.s32.totalorder %s24, 0
      %p275 = por %p273, %p274
      %p276 = scmp.ne.s32.totalorder %s262, %s263
      %p277 = scmp.eq.s32.totalorder %s25, 1
      %p278 = por %p276, %p277
      %p280 = scmp.ne.s32.totalorder %s263, %s279
      %p281 = scmp.eq.s32.totalorder %s25, 0
      %p282 = por %p280, %p281
      %p283 = scmp.le.s32.totalorder 1, %s19
      %p284 = scmp.lt.s32.totalorder %s19, 3
      %p285 = pnand %p283, %p284
      %p286 = pneg %p285
      // Predicated region
      $region9: #{tpu_custom_call.1} parent=5 // pred_check
        _
      $region10: #{tpu_custom_call.1} parent=5 // pred_check_branch
        %288 = sbr.rel (%p285) target = $region12
      $region11: #{tpu_custom_call.1} parent=5 // pred_region
        %s289 = ssub.s32 %s19, 1
        // Predicated region
        $region13: #{tpu_custom_call.1} parent=11 // pred_check
          %p290 = pneg %p40
        $region14: #{tpu_custom_call.1} parent=11 // pred_check_branch
          %292 = sbr.rel (%p290) target = $region16
        $region15: #{tpu_custom_call.1} parent=11 // pred_region
          _
        $region16: #{tpu_custom_call.1} parent=11 // pred_fallthru
          _
        // Predicated region
        $region17: #{tpu_custom_call.1} parent=11 // pred_check
          %p293 = pneg %p61
        $region18: #{tpu_custom_call.1} parent=11 // pred_check_branch
          %295 = sbr.rel (%p293) target = $region20
        $region19: #{tpu_custom_call.1} parent=11 // pred_region
          _
        $region20: #{tpu_custom_call.1} parent=11 // pred_fallthru
          _
        // Predicated region
        $region21: #{tpu_custom_call.1} parent=11 // pred_check
          %p296 = pneg %p82
        $region22: #{tpu_custom_call.1} parent=11 // pred_check_branch
          %298 = sbr.rel (%p296) target = $region24
        $region23: #{tpu_custom_call.1} parent=11 // pred_region
          _
        $region24: #{tpu_custom_call.1} parent=11 // pred_fallthru
          _
        // Predicated region
        $region25: #{tpu_custom_call.1} parent=11 // pred_check
          %p299 = pneg %p103
        $region26: #{tpu_custom_call.1} parent=11 // pred_check_branch
          %301 = sbr.rel (%p299) target = $region28
        $region27: #{tpu_custom_call.1} parent=11 // pred_region
          _
        $region28: #{tpu_custom_call.1} parent=11 // pred_fallthru
          _
        // Predicated region
        $region29: #{tpu_custom_call.1} parent=11 // pred_check
          %p302 = pneg %p124
        $region30: #{tpu_custom_call.1} parent=11 // pred_check_branch
          %304 = sbr.rel (%p302) target = $region32
        $region31: #{tpu_custom_call.1} parent=11 // pred_region
          _
        $region32: #{tpu_custom_call.1} parent=11 // pred_fallthru
          _
        // Predicated region
        $region33: #{tpu_custom_call.1} parent=11 // pred_check
          %p305 = pneg %p145
        $region34: #{tpu_custom_call.1} parent=11 // pred_check_branch
          %307 = sbr.rel (%p305) target = $region36
        $region35: #{tpu_custom_call.1} parent=11 // pred_region
          _
        $region36: #{tpu_custom_call.1} parent=11 // pred_fallthru
          _
      $region12: #{tpu_custom_call.1} parent=5 // pred_fallthru
        _
      %p308 = scmp.lt.s32.totalorder %s19, 2
      // Predicated region
      $region37: #{tpu_custom_call.1} parent=5 // pred_check
        %p309 = pneg %p308
      $region38: #{tpu_custom_call.1} parent=5 // pred_check_branch
        %311 = sbr.rel (%p309) target = $region40
      $region39: #{tpu_custom_call.1} parent=5 // pred_region
        // Predicated region
        $region41: #{tpu_custom_call.1} parent=39 // pred_check
          %p312 = pneg %p165
        $region42: #{tpu_custom_call.1} parent=39 // pred_check_branch
          %314 = sbr.rel (%p312) target = $region44
        $region43: #{tpu_custom_call.1} parent=39 // pred_region
          %p315 = scmp.lt.s32.totalorder %s19, 1
          %s316 = scalar_select %p315, %s19, 1
          %s317 = smul.addr %s316, 12
          %s318 = smul.addr %s317, 8
          %s319 = scalar_lea.vmem %s6, %s318
        $region44: #{tpu_custom_call.1} parent=39 // pred_fallthru
          _
        // Predicated region
        $region45: #{tpu_custom_call.1} parent=39 // pred_check
          %p320 = pneg %p191
        $region46: #{tpu_custom_call.1} parent=39 // pred_check_branch
          %322 = sbr.rel (%p320) target = $region48
        $region47: #{tpu_custom_call.1} parent=39 // pred_region
          %p323 = scmp.lt.s32.totalorder %s19, 1
          %s324 = scalar_select %p323, %s19, 1
          %s325 = smul.addr %s324, 4
          %s326 = smul.addr %s325, 8
          %s327 = scalar_lea.vmem %s7, %s326
        $region48: #{tpu_custom_call.1} parent=39 // pred_fallthru
          _
        // Predicated region
        $region49: #{tpu_custom_call.1} parent=39 // pred_check
          %p328 = pneg %p217
        $region50: #{tpu_custom_call.1} parent=39 // pred_check_branch
          %330 = sbr.rel (%p328) target = $region52
        $region51: #{tpu_custom_call.1} parent=39 // pred_region
          %p331 = scmp.lt.s32.totalorder %s19, 1
          %s332 = scalar_select %p331, %s19, 1
          %s333 = smul.addr %s332, 4
          %s334 = smul.addr %s333, 8
          %s335 = scalar_lea.vmem %s8, %s334
        $region52: #{tpu_custom_call.1} parent=39 // pred_fallthru
          _
        // Predicated region
        $region53: #{tpu_custom_call.1} parent=39 // pred_check
          %p336 = pneg %p243
        $region54: #{tpu_custom_call.1} parent=39 // pred_check_branch
          %338 = sbr.rel (%p336) target = $region56
        $region55: #{tpu_custom_call.1} parent=39 // pred_region
          %p339 = scmp.lt.s32.totalorder %s19, 1
          %s340 = scalar_select %p339, %s19, 1
          %s341 = smul.addr %s340, 4
          %s342 = smul.addr %s341, 8
          %s343 = scalar_lea.vmem %s9, %s342
        $region56: #{tpu_custom_call.1} parent=39 // pred_fallthru
          _
      $region40: #{tpu_custom_call.1} parent=5 // pred_fallthru
        _
      %p344 = scmp.le.s32.totalorder 1, %s19
      %p345 = scmp.lt.s32.totalorder %s19, 3
      %p346 = pnand %p344, %p345
      %p347 = pneg %p346
      // Predicated region
      $region57: #{tpu_custom_call.1} parent=5 // pred_check
        _
      $region58: #{tpu_custom_call.1} parent=5 // pred_check_branch
        %349 = sbr.rel (%p346) target = $region60
      $region59: #{tpu_custom_call.1} parent=5 // pred_region
        %s350 = ssub.s32 %s19, 1
        %p351 = pneg %p40
        %p352 = pneg %p37
        %p353 = pneg %p61
        %p354 = pneg %p58
        %p355 = pneg %p82
        %p356 = pneg %p79
        %p357 = pneg %p103
        %p358 = pneg %p100
        %p359 = pneg %p124
        %p360 = pneg %p121
        %p361 = pneg %p145
        %p362 = pneg %p142
        %p363 = scmp.lt.s32.totalorder %s24, 1
        %s364 = scalar_select %p363, %s24, 1
        %s365 = smul.addr %s364, 12
        %s366 = smul.addr %s365, 8
        %s367 = scalar_lea.vmem %s6, %s366
        %p368 = pneg %p171
        %p369 = pneg %p168
        %p370 = scmp.lt.s32.totalorder %s24, 1
        %s371 = scalar_select %p370, %s24, 1
        %s372 = smul.addr %s371, 4
        %s373 = smul.addr %s372, 8
        %s374 = scalar_lea.vmem %s7, %s373
        %p375 = pneg %p197
        %p376 = pneg %p194
        %p377 = scmp.lt.s32.totalorder %s24, 1
        %s378 = scalar_select %p377, %s24, 1
        %s379 = smul.addr %s378, 4
        %s380 = smul.addr %s379, 8
        %s381 = scalar_lea.vmem %s8, %s380
        %p382 = pneg %p223
        %p383 = pneg %p220
        %p384 = scmp.lt.s32.totalorder %s24, 1
        %s385 = scalar_select %p384, %s24, 1
        %s386 = smul.addr %s385, 4
        %s387 = smul.addr %s386, 8
        %s388 = scalar_lea.vmem %s9, %s387
        %p389 = pneg %p249
        %p390 = pneg %p246
        %p391 = pneg %p275
        %p392 = pneg %p272
        %s393 = sand.u32 %s262, 1
        %s394 = scalar_lea.sflag [#allocation3], %s393
        %s395 = sand.u32 %s262, 1
        %s396 = smul.addr %s395, 128
        %s397 = scalar_lea.vmem [#allocation2], %s396
        %p398 = scmp.lt.s32.totalorder %s24, 1
        %s399 = scalar_select %p398, %s24, 1
        %s400 = smul.addr %s399, 12
        %s401 = smul.addr %s400, 8
        %s402 = scalar_lea.vmem %s6, %s401
        %p403 = scmp.lt.s32.totalorder %s24, 1
        %s404 = scalar_select %p403, %s24, 1
        %s405 = smul.addr %s404, 4
        %s406 = smul.addr %s405, 8
        %s407 = scalar_lea.vmem %s7, %s406
        %p408 = scmp.lt.s32.totalorder %s24, 1
        %s409 = scalar_select %p408, %s24, 1
        %s410 = smul.addr %s409, 4
        %s411 = smul.addr %s410, 8
        %s412 = scalar_lea.vmem %s8, %s411
        %p413 = scmp.lt.s32.totalorder %s24, 1
        %s414 = scalar_select %p413, %s24, 1
        %s415 = smul.addr %s414, 4
        %s416 = smul.addr %s415, 8
        %s417 = scalar_lea.vmem %s9, %s416
        %s418 = smul.u32 4, %s24
        %v419 = vld [vmem:[%s0] sm:$0xff]
        %v420 = vld [vmem:[%s0 + $0x8] sm:$0xff]
        %v421 = vld [vmem:[%s0 + $0x10] sm:$0xff]
        %v422 = vld [vmem:[%s0 + $0x18] sm:$0xff]
        %v423 = vld [vmem:[%s2] sm:$0xff]
        %v424 = vld [vmem:[%s2 + $0x8] sm:$0xff]
        %v425 = vld [vmem:[%s2 + $0x10] sm:$0xff]
        %v426 = vld [vmem:[%s2 + $0x18] sm:$0xff]
        %427 = vrot.lane.b32.xlu0 %v419, 17
        %v428 = vpop.permute.xlu0 %427
        %429 = vrot.lane.b32.xlu0 %v420, 17
        %v430 = vpop.permute.xlu0 %429
        %431 = vrot.lane.b32.xlu0 %v421, 17
        %v432 = vpop.permute.xlu0 %431
        %433 = vrot.lane.b32.xlu0 %v422, 17
        %v434 = vpop.permute.xlu0 %433
        %v435 = vlaneseq
        %v436 = vand.u32 %v435, 127
        %vm437 = vcmp.lt.s32.totalorder %v436, 17
        %v438 = vsel %vm437, %v432, %v434
        %v439 = vsel %vm437, %v430, %v432
        %v440 = vsel %vm437, %v428, %v430
        %v441 = vsel %vm437, %v434, %v428
        %v442 = vld [vmem:[%s1] sm:$0xf]
        %v444 = vlaneseq
        %v445 = vshrl.u32 %v444, 7
        %v446 = vsub.s32 0, %v445
        %v447 = vrot.slane %v442, %v446
        %v448 = vlaneseq
        %v449 = vshrl.u32 %v448, 7
        %v450 = vsub.s32 1, %v449
        %v451 = vrot.slane %v442, %v450
        %v452 = vlaneseq
        %v453 = vshrl.u32 %v452, 7
        %v454 = vsub.s32 2, %v453
        %v455 = vrot.slane %v442, %v454
        %v456 = vlaneseq
        %v457 = vshrl.u32 %v456, 7
        %v458 = vsub.s32 3, %v457
        %v459 = vrot.slane %v442, %v458
        %v464 = vmul.f32 %v441, %v447
        %v465 = vmul.f32 %v440, %v451
        %v466 = vmul.f32 %v439, %v455
        %v467 = vmul.f32 %v438, %v459
        %468 = vrot.lane.b32.xlu0 %v419, 16
        %v469 = vpop.permute.xlu0 %468
        %470 = vrot.lane.b32.xlu0 %v420, 16
        %v471 = vpop.permute.xlu0 %470
        %472 = vrot.lane.b32.xlu0 %v421, 16
        %v473 = vpop.permute.xlu0 %472
        %474 = vrot.lane.b32.xlu0 %v422, 16
        %v475 = vpop.permute.xlu0 %474
        %vm476 = vcmp.lt.s32.totalorder %v436, 16
        %v477 = vsel %vm476, %v473, %v475
        %v478 = vsel %vm476, %v471, %v473
        %v479 = vsel %vm476, %v469, %v471
        %v480 = vsel %vm476, %v475, %v469
        %s481 = scalar_lea.vmem %s1, 4
        %v482 = vld [vmem:[%s481] sm:$0xf]
        %v484 = vlaneseq
        %v485 = vshrl.u32 %v484, 7
        %v486 = vsub.s32 0, %v485
        %v487 = vrot.slane %v482, %v486
        %v488 = vlaneseq
        %v489 = vshrl.u32 %v488, 7
        %v490 = vsub.s32 1, %v489
        %v491 = vrot.slane %v482, %v490
        %v492 = vlaneseq
        %v493 = vshrl.u32 %v492, 7
        %v494 = vsub.s32 2, %v493
        %v495 = vrot.slane %v482, %v494
        %v496 = vlaneseq
        %v497 = vshrl.u32 %v496, 7
        %v498 = vsub.s32 3, %v497
        %v499 = vrot.slane %v482, %v498
        %v504 = vmul.f32 %v480, %v487
        %v505 = vmul.f32 %v479, %v491
        %v506 = vmul.f32 %v478, %v495
        %v507 = vmul.f32 %v477, %v499
        %508 = vrot.lane.b32.xlu0 %v419, 15
        %v509 = vpop.permute.xlu0 %508
        %510 = vrot.lane.b32.xlu0 %v420, 15
        %v511 = vpop.permute.xlu0 %510
        %512 = vrot.lane.b32.xlu0 %v421, 15
        %v513 = vpop.permute.xlu0 %512
        %514 = vrot.lane.b32.xlu0 %v422, 15
        %v515 = vpop.permute.xlu0 %514
        %vm516 = vcmp.lt.s32.totalorder %v436, 15
        %v517 = vsel %vm516, %v513, %v515
        %v518 = vsel %vm516, %v511, %v513
        %v519 = vsel %vm516, %v509, %v511
        %v520 = vsel %vm516, %v515, %v509
        %s521 = scalar_lea.vmem %s1, 8
        %v522 = vld [vmem:[%s521] sm:$0xf]
        %v524 = vlaneseq
        %v525 = vshrl.u32 %v524, 7
        %v526 = vsub.s32 0, %v525
        %v527 = vrot.slane %v522, %v526
        %v528 = vlaneseq
        %v529 = vshrl.u32 %v528, 7
        %v530 = vsub.s32 1, %v529
        %v531 = vrot.slane %v522, %v530
        %v532 = vlaneseq
        %v533 = vshrl.u32 %v532, 7
        %v534 = vsub.s32 2, %v533
        %v535 = vrot.slane %v522, %v534
        %v536 = vlaneseq
        %v537 = vshrl.u32 %v536, 7
        %v538 = vsub.s32 3, %v537
        %v539 = vrot.slane %v522, %v538
        %v544 = vmul.f32 %v520, %v527
        %v545 = vmul.f32 %v519, %v531
        %v546 = vmul.f32 %v518, %v535
        %v547 = vmul.f32 %v517, %v539
        %548 = vrot.lane.b32.xlu0 %v419, 1
        %v549 = vpop.permute.xlu0 %548
        %550 = vrot.lane.b32.xlu0 %v420, 1
        %v551 = vpop.permute.xlu0 %550
        %552 = vrot.lane.b32.xlu0 %v421, 1
        %v553 = vpop.permute.xlu0 %552
        %554 = vrot.lane.b32.xlu0 %v422, 1
        %v555 = vpop.permute.xlu0 %554
        %vm556 = vcmp.lt.s32.totalorder %v436, 1
        %v557 = vsel %vm556, %v553, %v555
        %v558 = vsel %vm556, %v551, %v553
        %v559 = vsel %vm556, %v549, %v551
        %v560 = vsel %vm556, %v555, %v549
        %s561 = scalar_lea.vmem %s1, 12
        %v562 = vld [vmem:[%s561] sm:$0xf]
        %v564 = vlaneseq
        %v565 = vshrl.u32 %v564, 7
        %v566 = vsub.s32 0, %v565
        %v567 = vrot.slane %v562, %v566
        %v568 = vlaneseq
        %v569 = vshrl.u32 %v568, 7
        %v570 = vsub.s32 1, %v569
        %v571 = vrot.slane %v562, %v570
        %v572 = vlaneseq
        %v573 = vshrl.u32 %v572, 7
        %v574 = vsub.s32 2, %v573
        %v575 = vrot.slane %v562, %v574
        %v576 = vlaneseq
        %v577 = vshrl.u32 %v576, 7
        %v578 = vsub.s32 3, %v577
        %v579 = vrot.slane %v562, %v578
        %v584 = vmul.f32 %v560, %v567
        %v585 = vmul.f32 %v559, %v571
        %v586 = vmul.f32 %v558, %v575
        %v587 = vmul.f32 %v557, %v579
        %588 = vrot.lane.b32.xlu0 %v419, 127
        %v589 = vpop.permute.xlu0 %588
        %590 = vrot.lane.b32.xlu0 %v420, 127
        %v591 = vpop.permute.xlu0 %590
        %592 = vrot.lane.b32.xlu0 %v421, 127
        %v593 = vpop.permute.xlu0 %592
        %594 = vrot.lane.b32.xlu0 %v422, 127
        %v595 = vpop.permute.xlu0 %594
        %vm596 = vcmp.lt.s32.totalorder %v436, 127
        %v597 = vsel %vm596, %v593, %v595
        %v598 = vsel %vm596, %v591, %v593
        %v599 = vsel %vm596, %v589, %v591
        %v600 = vsel %vm596, %v595, %v589
        %s601 = scalar_lea.vmem %s1, 20
        %v602 = vld [vmem:[%s601] sm:$0xf]
        %v604 = vlaneseq
        %v605 = vshrl.u32 %v604, 7
        %v606 = vsub.s32 0, %v605
        %v607 = vrot.slane %v602, %v606
        %v608 = vlaneseq
        %v609 = vshrl.u32 %v608, 7
        %v610 = vsub.s32 1, %v609
        %v611 = vrot.slane %v602, %v610
        %v612 = vlaneseq
        %v613 = vshrl.u32 %v612, 7
        %v614 = vsub.s32 2, %v613
        %v615 = vrot.slane %v602, %v614
        %v616 = vlaneseq
        %v617 = vshrl.u32 %v616, 7
        %v618 = vsub.s32 3, %v617
        %v619 = vrot.slane %v602, %v618
        %v624 = vmul.f32 %v599, %v607
        %v625 = vmul.f32 %v598, %v611
        %v626 = vmul.f32 %v597, %v615
        %v627 = vmul.f32 %v600, %v619
        %628 = vrot.lane.b32.xlu0 %v419, 113
        %v629 = vpop.permute.xlu0 %628
        %630 = vrot.lane.b32.xlu0 %v420, 113
        %v631 = vpop.permute.xlu0 %630
        %632 = vrot.lane.b32.xlu0 %v421, 113
        %v633 = vpop.permute.xlu0 %632
        %634 = vrot.lane.b32.xlu0 %v422, 113
        %v635 = vpop.permute.xlu0 %634
        %vm636 = vcmp.lt.s32.totalorder %v436, 113
        %v637 = vsel %vm636, %v633, %v635
        %v638 = vsel %vm636, %v631, %v633
        %v639 = vsel %vm636, %v629, %v631
        %v640 = vsel %vm636, %v635, %v629
        %s641 = scalar_lea.vmem %s1, 24
        %v642 = vld [vmem:[%s641] sm:$0xf]
        %v644 = vlaneseq
        %v645 = vshrl.u32 %v644, 7
        %v646 = vsub.s32 0, %v645
        %v647 = vrot.slane %v642, %v646
        %v648 = vlaneseq
        %v649 = vshrl.u32 %v648, 7
        %v650 = vsub.s32 1, %v649
        %v651 = vrot.slane %v642, %v650
        %v652 = vlaneseq
        %v653 = vshrl.u32 %v652, 7
        %v654 = vsub.s32 2, %v653
        %v655 = vrot.slane %v642, %v654
        %v656 = vlaneseq
        %v657 = vshrl.u32 %v656, 7
        %v658 = vsub.s32 3, %v657
        %v659 = vrot.slane %v642, %v658
        %v664 = vmul.f32 %v639, %v647
        %v665 = vmul.f32 %v638, %v651
        %v666 = vmul.f32 %v637, %v655
        %v667 = vmul.f32 %v640, %v659
        %668 = vrot.lane.b32.xlu0 %v419, 112
        %v669 = vpop.permute.xlu0 %668
        %670 = vrot.lane.b32.xlu0 %v420, 112
        %v671 = vpop.permute.xlu0 %670
        %672 = vrot.lane.b32.xlu0 %v421, 112
        %v673 = vpop.permute.xlu0 %672
        %674 = vrot.lane.b32.xlu0 %v422, 112
        %v675 = vpop.permute.xlu0 %674
        %vm676 = vcmp.lt.s32.totalorder %v436, 112
        %v677 = vsel %vm676, %v673, %v675
        %v678 = vsel %vm676, %v671, %v673
        %v679 = vsel %vm676, %v669, %v671
        %v680 = vsel %vm676, %v675, %v669
        %s681 = scalar_lea.vmem %s1, 28
        %v682 = vld [vmem:[%s681] sm:$0xf]
        %v684 = vlaneseq
        %v685 = vshrl.u32 %v684, 7
        %v686 = vsub.s32 0, %v685
        %v687 = vrot.slane %v682, %v686
        %v688 = vlaneseq
        %v689 = vshrl.u32 %v688, 7
        %v690 = vsub.s32 1, %v689
        %v691 = vrot.slane %v682, %v690
        %v692 = vlaneseq
        %v693 = vshrl.u32 %v692, 7
        %v694 = vsub.s32 2, %v693
        %v695 = vrot.slane %v682, %v694
        %v696 = vlaneseq
        %v697 = vshrl.u32 %v696, 7
        %v698 = vsub.s32 3, %v697
        %v699 = vrot.slane %v682, %v698
        %v704 = vmul.f32 %v679, %v687
        %v705 = vmul.f32 %v678, %v691
        %v706 = vmul.f32 %v677, %v695
        %v707 = vmul.f32 %v680, %v699
        %708 = vrot.lane.b32.xlu0 %v419, 111
        %v709 = vpop.permute.xlu0 %708
        %710 = vrot.lane.b32.xlu0 %v420, 111
        %v711 = vpop.permute.xlu0 %710
        %712 = vrot.lane.b32.xlu0 %v421, 111
        %v713 = vpop.permute.xlu0 %712
        %714 = vrot.lane.b32.xlu0 %v422, 111
        %v715 = vpop.permute.xlu0 %714
        %vm716 = vcmp.lt.s32.totalorder %v436, 111
        %v717 = vsel %vm716, %v713, %v715
        %v718 = vsel %vm716, %v711, %v713
        %v719 = vsel %vm716, %v709, %v711
        %v720 = vsel %vm716, %v715, %v709
        %s721 = scalar_lea.vmem %s1, 32
        %v722 = vld [vmem:[%s721] sm:$0xf]
        %v724 = vlaneseq
        %v725 = vshrl.u32 %v724, 7
        %v726 = vsub.s32 0, %v725
        %v727 = vrot.slane %v722, %v726
        %v728 = vlaneseq
        %v729 = vshrl.u32 %v728, 7
        %v730 = vsub.s32 1, %v729
        %v731 = vrot.slane %v722, %v730
        %v732 = vlaneseq
        %v733 = vshrl.u32 %v732, 7
        %v734 = vsub.s32 2, %v733
        %v735 = vrot.slane %v722, %v734
        %v736 = vlaneseq
        %v737 = vshrl.u32 %v736, 7
        %v738 = vsub.s32 3, %v737
        %v739 = vrot.slane %v722, %v738
        %v744 = vmul.f32 %v719, %v727
        %v745 = vmul.f32 %v718, %v731
        %v746 = vmul.f32 %v717, %v735
        %v747 = vmul.f32 %v720, %v739
        %v748 = vld [vmem:[%s3] sm:$0xff]
        %v749 = vld [vmem:[%s3 + $0x8] sm:$0xff]
        %v750 = vld [vmem:[%s3 + $0x10] sm:$0xff]
        %v751 = vld [vmem:[%s3 + $0x18] sm:$0xff]
        %v752 = vld [vmem:[%s4] sm:$0xff]
        %v753 = vld [vmem:[%s4 + $0x8] sm:$0xff]
        %v754 = vld [vmem:[%s4 + $0x10] sm:$0xff]
        %v755 = vld [vmem:[%s4 + $0x18] sm:$0xff]
        %v756 = vld [vmem:[%s5] sm:$0xff]
        %v757 = vld [vmem:[%s5 + $0x8] sm:$0xff]
        %v758 = vld [vmem:[%s5 + $0x10] sm:$0xff]
        %v759 = vld [vmem:[%s5 + $0x18] sm:$0xff]
        %761 = vset.pattern.permute.xlu0 0
        %762 = vperm.xlu0 %761, %v748
        %v763 = vpop.permute.xlu0 %762
        %766 = vset.pattern.permute.xlu0 0
        %767 = vperm.xlu0 %766, %v749
        %v768 = vpop.permute.xlu0 %767
        %771 = vset.pattern.permute.xlu0 0
        %772 = vperm.xlu0 %771, %v750
        %v773 = vpop.permute.xlu0 %772
        %776 = vset.pattern.permute.xlu0 0
        %777 = vperm.xlu0 %776, %v751
        %v778 = vpop.permute.xlu0 %777
        %vm780 = vcmask 588800
        %v782 = vsel %vm780, %v423, 0
        %v785 = vsel %vm780, %v424, 0
        %v788 = vsel %vm780, %v425, 0
        %v791 = vsel %vm780, %v426, 0
        %793 = vmatprep.subr.mxu0 0.0
        %794 = vmatpush1.msra.mxu0 0.0
        %795 = vmatprep.subr.mxu0 0.0
        %796 = vmatpush1.msra.mxu0 0.0
        %797 = vmatprep.subr.mxu0 0.0
        %798 = vmatpush1.msra.mxu0 0.0
        %799 = vmatprep.subr.mxu0 0.0
        %800 = vmatpush1.msra.mxu0 0.0
        %801 = vmatprep.subr.mxu0 0.0
        %802 = vmatpush1.msra.mxu0 0.0
        %803 = vmatprep.subr.mxu0 0.0
        %804 = vmatpush1.msra.mxu0 0.0
        %805 = vmatprep.subr.mxu0 0.0
        %806 = vmatpush1.msra.mxu0 0.0
        %807 = vmatprep.subr.mxu0 %v745
        %808 = vmatpush1.msra.mxu0 %v744
        %809 = vmatprep.subr.mxu0 %v705
        %810 = vmatpush1.msra.mxu0 %v704
        %811 = vmatprep.subr.mxu0 %v665
        %812 = vmatpush1.msra.mxu0 %v664
        %813 = vmatprep.subr.mxu0 %v625
        %814 = vmatpush1.msra.mxu0 %v624
        %815 = vmatprep.subr.mxu0 %v420
        %816 = vmatpush1.msra.mxu0 %v419
        %817 = vmatprep.subr.mxu0 %v585
        %818 = vmatpush1.msra.mxu0 %v584
        %819 = vmatprep.subr.mxu0 %v545
        %820 = vmatpush1.msra.mxu0 %v544
        %821 = vmatprep.subr.mxu0 %v505
        %822 = vmatpush1.msra.mxu0 %v504
        %823 = vmatprep.subr.mxu0 %v465
        %824 = vmatpush1.msra.mxu0 %v464
        %825 = vmatprep.subr.mxu0 0.0
        %826 = vmatpush2.msra.mxu0 0.0
        %827 = vmatprep.subr.mxu0 0.0
        %828 = vmatpush2.msra.mxu0 0.0
        %829 = vmatprep.subr.mxu0 0.0
        %830 = vmatpush2.msra.mxu0 0.0
        %831 = vmatprep.subr.mxu0 0.0
        %832 = vmatpush2.msra.mxu0 0.0
        %833 = vmatprep.subr.mxu0 0.0
        %834 = vmatpush2.msra.mxu0 0.0
        %835 = vmatprep.subr.mxu0 0.0
        %836 = vmatpush2.msra.mxu0 0.0
        %837 = vmatprep.subr.mxu0 0.0
        %838 = vmatpush2.msra.mxu0 0.0
        %839 = vmatprep.subr.mxu0 0.0
        %840 = vmatpush2.msra.mxu0 0.0
        %841 = vmatprep.subr.mxu0 0.0
        %842 = vmatpush2.msra.mxu0 0.0
        %843 = vmatprep.subr.mxu0 0.0
        %844 = vmatpush2.msra.mxu0 0.0
        %845 = vmatprep.subr.mxu0 0.0
        %846 = vmatpush2.msra.mxu0 0.0
        %847 = vmatprep.subr.mxu0 0.0
        %848 = vmatpush2.msra.mxu0 0.0
        %849 = vmatprep.subr.mxu0 0.0
        %850 = vmatpush2.msra.mxu0 0.0
        %851 = vmatprep.subr.mxu0 0.0
        %852 = vmatpush2.msra.mxu0 0.0
        %853 = vmatprep.subr.mxu0 0.0
        %854 = vmatpush2.msra.mxu0 0.0
        %855 = vmatprep.subr.mxu0 0.0
        %856 = vmatpush2.msra.mxu0 0.0
        %857 = vmatprep.mubr.f32.mxu0 0.0
        %858 = vmatmul.mubr.f32.gmra.mxu0 %v782
        %v859 = vpop.f32.mrf.mxu0
        %v860 = vadd.f32 %v763, %v859
        %v861 = vpop.f32.mrf.mxu0
        %v862 = vadd.f32 %v763, %v861
        %863 = vmatprep.mubr.f32.mxu0 0.0
        %864 = vmatmul.mubr.f32.gmra.mxu0 %v785
        %v865 = vpop.f32.mrf.mxu0
        %v866 = vadd.f32 %v768, %v865
        %v867 = vpop.f32.mrf.mxu0
        %v868 = vadd.f32 %v768, %v867
        %869 = vmatprep.mubr.f32.mxu0 0.0
        %870 = vmatmul.mubr.f32.gmra.mxu0 %v788
        %v871 = vpop.f32.mrf.mxu0
        %v872 = vadd.f32 %v773, %v871
        %v873 = vpop.f32.mrf.mxu0
        %v874 = vadd.f32 %v773, %v873
        %875 = vmatprep.mubr.f32.mxu0 0.0
        %876 = vmatmul.mubr.f32.gmra.mxu0 %v791
        %v877 = vpop.f32.mrf.mxu0
        %v878 = vadd.f32 %v778, %v877
        %v879 = vpop.f32.mrf.mxu0
        %v880 = vadd.f32 %v778, %v879
        %881 = vdwg.mxu0
        %882 = vmatprep.subr.mxu0 0.0
        %883 = vmatpush1.msra.mxu0 0.0
        %884 = vmatprep.subr.mxu0 0.0
        %885 = vmatpush1.msra.mxu0 0.0
        %886 = vmatprep.subr.mxu0 0.0
        %887 = vmatpush1.msra.mxu0 0.0
        %888 = vmatprep.subr.mxu0 0.0
        %889 = vmatpush1.msra.mxu0 0.0
        %890 = vmatprep.subr.mxu0 0.0
        %891 = vmatpush1.msra.mxu0 0.0
        %892 = vmatprep.subr.mxu0 0.0
        %893 = vmatpush1.msra.mxu0 0.0
        %894 = vmatprep.subr.mxu0 0.0
        %895 = vmatpush1.msra.mxu0 0.0
        %896 = vmatprep.subr.mxu0 %v747
        %897 = vmatpush1.msra.mxu0 %v746
        %898 = vmatprep.subr.mxu0 %v707
        %899 = vmatpush1.msra.mxu0 %v706
        %900 = vmatprep.subr.mxu0 %v667
        %901 = vmatpush1.msra.mxu0 %v666
        %902 = vmatprep.subr.mxu0 %v627
        %903 = vmatpush1.msra.mxu0 %v626
        %904 = vmatprep.subr.mxu0 %v422
        %905 = vmatpush1.msra.mxu0 %v421
        %906 = vmatprep.subr.mxu0 %v587
        %907 = vmatpush1.msra.mxu0 %v586
        %908 = vmatprep.subr.mxu0 %v547
        %909 = vmatpush1.msra.mxu0 %v546
        %910 = vmatprep.subr.mxu0 %v507
        %911 = vmatpush1.msra.mxu0 %v506
        %912 = vmatprep.subr.mxu0 %v467
        %913 = vmatpush1.msra.mxu0 %v466
        %914 = vmatprep.subr.mxu0 0.0
        %915 = vmatpush2.msra.mxu0 0.0
        %916 = vmatprep.subr.mxu0 0.0
        %917 = vmatpush2.msra.mxu0 0.0
        %918 = vmatprep.subr.mxu0 0.0
        %919 = vmatpush2.msra.mxu0 0.0
        %920 = vmatprep.subr.mxu0 0.0
        %921 = vmatpush2.msra.mxu0 0.0
        %922 = vmatprep.subr.mxu0 0.0
        %923 = vmatpush2.msra.mxu0 0.0
        %924 = vmatprep.subr.mxu0 0.0
        %925 = vmatpush2.msra.mxu0 0.0
        %926 = vmatprep.subr.mxu0 0.0
        %927 = vmatpush2.msra.mxu0 0.0
        %928 = vmatprep.subr.mxu0 0.0
        %929 = vmatpush2.msra.mxu0 0.0
        %930 = vmatprep.subr.mxu0 0.0
        %931 = vmatpush2.msra.mxu0 0.0
        %932 = vmatprep.subr.mxu0 0.0
        %933 = vmatpush2.msra.mxu0 0.0
        %934 = vmatprep.subr.mxu0 0.0
        %935 = vmatpush2.msra.mxu0 0.0
        %936 = vmatprep.subr.mxu0 0.0
        %937 = vmatpush2.msra.mxu0 0.0
        %938 = vmatprep.subr.mxu0 0.0
        %939 = vmatpush2.msra.mxu0 0.0
        %940 = vmatprep.subr.mxu0 0.0
        %941 = vmatpush2.msra.mxu0 0.0
        %942 = vmatprep.subr.mxu0 0.0
        %943 = vmatpush2.msra.mxu0 0.0
        %944 = vmatprep.subr.mxu0 0.0
        %945 = vmatpush2.msra.mxu0 0.0
        %946 = vmatprep.mubr.f32.mxu0 0.0
        %947 = vmatmul.mubr.f32.gmra.mxu0 %v782
        %v948 = vpop.f32.mrf.mxu0
        %v949 = vadd.f32 %v763, %v948
        %v950 = vpop.f32.mrf.mxu0
        %v951 = vadd.f32 %v763, %v950
        %952 = vmatprep.mubr.f32.mxu0 0.0
        %953 = vmatmul.mubr.f32.gmra.mxu0 %v785
        %v954 = vpop.f32.mrf.mxu0
        %v955 = vadd.f32 %v768, %v954
        %v956 = vpop.f32.mrf.mxu0
        %v957 = vadd.f32 %v768, %v956
        %958 = vmatprep.mubr.f32.mxu0 0.0
        %959 = vmatmul.mubr.f32.gmra.mxu0 %v788
        %v960 = vpop.f32.mrf.mxu0
        %v961 = vadd.f32 %v773, %v960
        %v962 = vpop.f32.mrf.mxu0
        %v963 = vadd.f32 %v773, %v962
        %964 = vmatprep.mubr.f32.mxu0 0.0
        %965 = vmatmul.mubr.f32.gmra.mxu0 %v791
        %v966 = vpop.f32.mrf.mxu0
        %v967 = vadd.f32 %v778, %v966
        %v968 = vpop.f32.mrf.mxu0
        %v969 = vadd.f32 %v778, %v968
        %970 = vdwg.mxu0
        %v971 = vmax.f32 %v860, 0.0
        %v972 = vmax.f32 %v862, 0.0
        %v973 = vmax.f32 %v949, 0.0
        %v974 = vmax.f32 %v951, 0.0
        %v975 = vmax.f32 %v866, 0.0
        %v976 = vmax.f32 %v868, 0.0
        %v977 = vmax.f32 %v955, 0.0
        %v978 = vmax.f32 %v957, 0.0
        %v979 = vmax.f32 %v872, 0.0
        %v980 = vmax.f32 %v874, 0.0
        %v981 = vmax.f32 %v961, 0.0
        %v982 = vmax.f32 %v963, 0.0
        %v983 = vmax.f32 %v878, 0.0
        %v984 = vmax.f32 %v880, 0.0
        %v985 = vmax.f32 %v967, 0.0
        %v986 = vmax.f32 %v969, 0.0
        %v987 = vadd.f32 %v971, %v972
        %v988 = vadd.f32 %v987, %v973
        %v989 = vadd.f32 %v988, %v974
        %990 = vadd.xlane.f32.xlu0 %v989
        %v991 = vpop.xlane.xlu0 %990
        %v992 = vadd.f32 %v975, %v976
        %v993 = vadd.f32 %v992, %v977
        %v994 = vadd.f32 %v993, %v978
        %995 = vadd.xlane.f32.xlu0 %v994
        %v996 = vpop.xlane.xlu0 %995
        %v997 = vadd.f32 %v979, %v980
        %v998 = vadd.f32 %v997, %v981
        %v999 = vadd.f32 %v998, %v982
        %1000 = vadd.xlane.f32.xlu0 %v999
        %v1001 = vpop.xlane.xlu0 %1000
        %v1002 = vadd.f32 %v983, %v984
        %v1003 = vadd.f32 %v1002, %v985
        %v1004 = vadd.f32 %v1003, %v986
        %1005 = vadd.xlane.f32.xlu0 %v1004
        %v1006 = vpop.xlane.xlu0 %1005
        %v1007 = vmul.f32 %v991, 0.001953125
        %v1008 = vmul.f32 %v996, 0.001953125
        %v1009 = vmul.f32 %v1001, 0.001953125
        %v1010 = vmul.f32 %v1006, 0.001953125
        %v1011 = vmul.f32 %v971, %v971
        %v1012 = vmul.f32 %v972, %v972
        %v1013 = vmul.f32 %v973, %v973
        %v1014 = vmul.f32 %v974, %v974
        %v1015 = vmul.f32 %v975, %v975
        %v1016 = vmul.f32 %v976, %v976
        %v1017 = vmul.f32 %v977, %v977
        %v1018 = vmul.f32 %v978, %v978
        %v1019 = vmul.f32 %v979, %v979
        %v1020 = vmul.f32 %v980, %v980
        %v1021 = vmul.f32 %v981, %v981
        %v1022 = vmul.f32 %v982, %v982
        %v1023 = vmul.f32 %v983, %v983
        %v1024 = vmul.f32 %v984, %v984
        %v1025 = vmul.f32 %v985, %v985
        %v1026 = vmul.f32 %v986, %v986
        %v1027 = vadd.f32 %v1011, %v1012
        %v1028 = vadd.f32 %v1027, %v1013
        %v1029 = vadd.f32 %v1028, %v1014
        %1030 = vadd.xlane.f32.xlu0 %v1029
        %v1031 = vpop.xlane.xlu0 %1030
        %v1032 = vadd.f32 %v1015, %v1016
        %v1033 = vadd.f32 %v1032, %v1017
        %v1034 = vadd.f32 %v1033, %v1018
        %1035 = vadd.xlane.f32.xlu0 %v1034
        %v1036 = vpop.xlane.xlu0 %1035
        %v1037 = vadd.f32 %v1019, %v1020
        %v1038 = vadd.f32 %v1037, %v1021
        %v1039 = vadd.f32 %v1038, %v1022
        %1040 = vadd.xlane.f32.xlu0 %v1039
        %v1041 = vpop.xlane.xlu0 %1040
        %v1042 = vadd.f32 %v1023, %v1024
        %v1043 = vadd.f32 %v1042, %v1025
        %v1044 = vadd.f32 %v1043, %v1026
        %1045 = vadd.xlane.f32.xlu0 %v1044
        %v1046 = vpop.xlane.xlu0 %1045
        %v1047 = vmul.f32 %v1031, 0.001953125
        %v1048 = vmul.f32 %v1036, 0.001953125
        %v1049 = vmul.f32 %v1041, 0.001953125
        %v1050 = vmul.f32 %v1046, 0.001953125
        %v1051 = vmul.f32 %v1007, %v1007
        %v1052 = vmul.f32 %v1008, %v1008
        %v1053 = vmul.f32 %v1009, %v1009
        %v1054 = vmul.f32 %v1010, %v1010
        %v1055 = vsub.f32 %v1047, %v1051
        %v1056 = vsub.f32 %v1048, %v1052
        %v1057 = vsub.f32 %v1049, %v1053
        %v1058 = vsub.f32 %v1050, %v1054
        %v1059 = vadd.f32 %v1055, 1e-05
        %v1060 = vadd.f32 %v1056, 1e-05
        %v1061 = vadd.f32 %v1057, 1e-05
        %v1062 = vadd.f32 %v1058, 1e-05
        %v1063 = vrsqrt.pop %v1059
        %v1064 = vrsqrt.pop %v1060
        %v1065 = vrsqrt.pop %v1061
        %v1066 = vrsqrt.pop %v1062
        %v1067 = vmul.f32 %v752, %v1063
        %v1068 = vmul.f32 %v753, %v1064
        %v1069 = vmul.f32 %v754, %v1065
        %v1070 = vmul.f32 %v755, %v1066
        %v1071 = vmul.f32 %v1007, %v1067
        %v1072 = vmul.f32 %v1008, %v1068
        %v1073 = vmul.f32 %v1009, %v1069
        %v1074 = vmul.f32 %v1010, %v1070
        %v1075 = vsub.f32 %v756, %v1071
        %v1076 = vsub.f32 %v757, %v1072
        %v1077 = vsub.f32 %v758, %v1073
        %v1078 = vsub.f32 %v759, %v1074
        %1080 = vset.pattern.permute.xlu0 0
        %1081 = vperm.xlu0 %1080, %v1067
        %v1082 = vpop.permute.xlu0 %1081
        %1085 = vset.pattern.permute.xlu0 0
        %1086 = vperm.xlu0 %1085, %v1068
        %v1087 = vpop.permute.xlu0 %1086
        %1090 = vset.pattern.permute.xlu0 0
        %1091 = vperm.xlu0 %1090, %v1069
        %v1092 = vpop.permute.xlu0 %1091
        %1095 = vset.pattern.permute.xlu0 0
        %1096 = vperm.xlu0 %1095, %v1070
        %v1097 = vpop.permute.xlu0 %1096
        %v1099 = vmul.f32 %v971, %v1082
        %v1100 = vmul.f32 %v972, %v1082
        %v1101 = vmul.f32 %v973, %v1082
        %v1102 = vmul.f32 %v974, %v1082
        %v1103 = vmul.f32 %v975, %v1087
        %v1104 = vmul.f32 %v976, %v1087
        %v1105 = vmul.f32 %v977, %v1087
        %v1106 = vmul.f32 %v978, %v1087
        %v1107 = vmul.f32 %v979, %v1092
        %v1108 = vmul.f32 %v980, %v1092
        %v1109 = vmul.f32 %v981, %v1092
        %v1110 = vmul.f32 %v982, %v1092
        %v1111 = vmul.f32 %v983, %v1097
        %v1112 = vmul.f32 %v984, %v1097
        %v1113 = vmul.f32 %v985, %v1097
        %v1114 = vmul.f32 %v986, %v1097
        %1116 = vset.pattern.permute.xlu0 0
        %1117 = vperm.xlu0 %1116, %v1075
        %v1118 = vpop.permute.xlu0 %1117
        %1121 = vset.pattern.permute.xlu0 0
        %1122 = vperm.xlu0 %1121, %v1076
        %v1123 = vpop.permute.xlu0 %1122
        %1126 = vset.pattern.permute.xlu0 0
        %1127 = vperm.xlu0 %1126, %v1077
        %v1128 = vpop.permute.xlu0 %1127
        %1131 = vset.pattern.permute.xlu0 0
        %1132 = vperm.xlu0 %1131, %v1078
        %v1133 = vpop.permute.xlu0 %1132
        %v1135 = vadd.f32 %v1099, %v1118
        %v1136 = vadd.f32 %v1100, %v1118
        %v1137 = vadd.f32 %v1101, %v1118
        %v1138 = vadd.f32 %v1102, %v1118
        %v1139 = vadd.f32 %v1103, %v1123
        %v1140 = vadd.f32 %v1104, %v1123
        %v1141 = vadd.f32 %v1105, %v1123
        %v1142 = vadd.f32 %v1106, %v1123
        %v1143 = vadd.f32 %v1107, %v1128
        %v1144 = vadd.f32 %v1108, %v1128
        %v1145 = vadd.f32 %v1109, %v1128
        %v1146 = vadd.f32 %v1110, %v1128
        %v1147 = vadd.f32 %v1111, %v1133
        %v1148 = vadd.f32 %v1112, %v1133
        %v1149 = vadd.f32 %v1113, %v1133
        %v1150 = vadd.f32 %v1114, %v1133
        %v1151 = vld [vmem:[%s402] sm:$0xff]
        %v1152 = vld [vmem:[%s402 + $0x8] sm:$0xff]
        %v1153 = vld [vmem:[%s402 + $0x10] sm:$0xff]
        %v1154 = vld [vmem:[%s402 + $0x18] sm:$0xff]
        %v1155 = vld [vmem:[%s402 + $0x20] sm:$0xff]
        %v1156 = vld [vmem:[%s402 + $0x28] sm:$0xff]
        %v1157 = vld [vmem:[%s402 + $0x30] sm:$0xff]
        %v1158 = vld [vmem:[%s402 + $0x38] sm:$0xff]
        %v1159 = vld [vmem:[%s402 + $0x40] sm:$0xff]
        %v1160 = vld [vmem:[%s402 + $0x48] sm:$0xff]
        %v1161 = vld [vmem:[%s402 + $0x50] sm:$0xff]
        %v1162 = vld [vmem:[%s402 + $0x58] sm:$0xff]
        %1163 = vrot.lane.b32.xlu0 %v1135, 17
        %v1164 = vpop.permute.xlu0 %1163
        %1165 = vrot.lane.b32.xlu0 %v1139, 17
        %v1166 = vpop.permute.xlu0 %1165
        %1167 = vrot.lane.b32.xlu0 %v1143, 17
        %v1168 = vpop.permute.xlu0 %1167
        %1169 = vrot.lane.b32.xlu0 %v1147, 17
        %v1170 = vpop.permute.xlu0 %1169
        %1171 = vrot.lane.b32.xlu0 %v1136, 17
        %v1172 = vpop.permute.xlu0 %1171
        %1173 = vrot.lane.b32.xlu0 %v1140, 17
        %v1174 = vpop.permute.xlu0 %1173
        %1175 = vrot.lane.b32.xlu0 %v1144, 17
        %v1176 = vpop.permute.xlu0 %1175
        %1177 = vrot.lane.b32.xlu0 %v1148, 17
        %v1178 = vpop.permute.xlu0 %1177
        %1179 = vrot.lane.b32.xlu0 %v1137, 17
        %v1180 = vpop.permute.xlu0 %1179
        %1181 = vrot.lane.b32.xlu0 %v1141, 17
        %v1182 = vpop.permute.xlu0 %1181
        %1183 = vrot.lane.b32.xlu0 %v1145, 17
        %v1184 = vpop.permute.xlu0 %1183
        %1185 = vrot.lane.b32.xlu0 %v1149, 17
        %v1186 = vpop.permute.xlu0 %1185
        %1187 = vrot.lane.b32.xlu0 %v1138, 17
        %v1188 = vpop.permute.xlu0 %1187
        %1189 = vrot.lane.b32.xlu0 %v1142, 17
        %v1190 = vpop.permute.xlu0 %1189
        %1191 = vrot.lane.b32.xlu0 %v1146, 17
        %v1192 = vpop.permute.xlu0 %1191
        %1193 = vrot.lane.b32.xlu0 %v1150, 17
        %v1194 = vpop.permute.xlu0 %1193
        %v1195 = vsel %vm437, %v1180, %v1188
        %v1196 = vsel %vm437, %v1182, %v1190
        %v1197 = vsel %vm437, %v1184, %v1192
        %v1198 = vsel %vm437, %v1186, %v1194
        %v1199 = vsel %vm437, %v1172, %v1180
        %v1200 = vsel %vm437, %v1174, %v1182
        %v1201 = vsel %vm437, %v1176, %v1184
        %v1202 = vsel %vm437, %v1178, %v1186
        %v1203 = vsel %vm437, %v1164, %v1172
        %v1204 = vsel %vm437, %v1166, %v1174
        %v1205 = vsel %vm437, %v1168, %v1176
        %v1206 = vsel %vm437, %v1170, %v1178
        %v1207 = vsel %vm437, %v1188, %v1164
        %v1208 = vsel %vm437, %v1190, %v1166
        %v1209 = vsel %vm437, %v1192, %v1168
        %v1210 = vsel %vm437, %v1194, %v1170
        %v1211 = vmul.f32 %v1207, %v447
        %v1212 = vmul.f32 %v1203, %v451
        %v1213 = vmul.f32 %v1199, %v455
        %v1214 = vmul.f32 %v1195, %v459
        %v1215 = vmul.f32 %v1208, %v447
        %v1216 = vmul.f32 %v1204, %v451
        %v1217 = vmul.f32 %v1200, %v455
        %v1218 = vmul.f32 %v1196, %v459
        %v1219 = vmul.f32 %v1209, %v447
        %v1220 = vmul.f32 %v1205, %v451
        %v1221 = vmul.f32 %v1201, %v455
        %v1222 = vmul.f32 %v1197, %v459
        %v1223 = vmul.f32 %v1210, %v447
        %v1224 = vmul.f32 %v1206, %v451
        %v1225 = vmul.f32 %v1202, %v455
        %v1226 = vmul.f32 %v1198, %v459
        %1227 = vrot.lane.b32.xlu0 %v1135, 16
        %v1228 = vpop.permute.xlu0 %1227
        %1229 = vrot.lane.b32.xlu0 %v1139, 16
        %v1230 = vpop.permute.xlu0 %1229
        %1231 = vrot.lane.b32.xlu0 %v1143, 16
        %v1232 = vpop.permute.xlu0 %1231
        %1233 = vrot.lane.b32.xlu0 %v1147, 16
        %v1234 = vpop.permute.xlu0 %1233
        %1235 = vrot.lane.b32.xlu0 %v1136, 16
        %v1236 = vpop.permute.xlu0 %1235
        %1237 = vrot.lane.b32.xlu0 %v1140, 16
        %v1238 = vpop.permute.xlu0 %1237
        %1239 = vrot.lane.b32.xlu0 %v1144, 16
        %v1240 = vpop.permute.xlu0 %1239
        %1241 = vrot.lane.b32.xlu0 %v1148, 16
        %v1242 = vpop.permute.xlu0 %1241
        %1243 = vrot.lane.b32.xlu0 %v1137, 16
        %v1244 = vpop.permute.xlu0 %1243
        %1245 = vrot.lane.b32.xlu0 %v1141, 16
        %v1246 = vpop.permute.xlu0 %1245
        %1247 = vrot.lane.b32.xlu0 %v1145, 16
        %v1248 = vpop.permute.xlu0 %1247
        %1249 = vrot.lane.b32.xlu0 %v1149, 16
        %v1250 = vpop.permute.xlu0 %1249
        %1251 = vrot.lane.b32.xlu0 %v1138, 16
        %v1252 = vpop.permute.xlu0 %1251
        %1253 = vrot.lane.b32.xlu0 %v1142, 16
        %v1254 = vpop.permute.xlu0 %1253
        %1255 = vrot.lane.b32.xlu0 %v1146, 16
        %v1256 = vpop.permute.xlu0 %1255
        %1257 = vrot.lane.b32.xlu0 %v1150, 16
        %v1258 = vpop.permute.xlu0 %1257
        %v1259 = vsel %vm476, %v1244, %v1252
        %v1260 = vsel %vm476, %v1246, %v1254
        %v1261 = vsel %vm476, %v1248, %v1256
        %v1262 = vsel %vm476, %v1250, %v1258
        %v1263 = vsel %vm476, %v1236, %v1244
        %v1264 = vsel %vm476, %v1238, %v1246
        %v1265 = vsel %vm476, %v1240, %v1248
        %v1266 = vsel %vm476, %v1242, %v1250
        %v1267 = vsel %vm476, %v1228, %v1236
        %v1268 = vsel %vm476, %v1230, %v1238
        %v1269 = vsel %vm476, %v1232, %v1240
        %v1270 = vsel %vm476, %v1234, %v1242
        %v1271 = vsel %vm476, %v1252, %v1228
        %v1272 = vsel %vm476, %v1254, %v1230
        %v1273 = vsel %vm476, %v1256, %v1232
        %v1274 = vsel %vm476, %v1258, %v1234
        %v1275 = vmul.f32 %v1271, %v487
        %v1276 = vmul.f32 %v1267, %v491
        %v1277 = vmul.f32 %v1263, %v495
        %v1278 = vmul.f32 %v1259, %v499
        %v1279 = vmul.f32 %v1272, %v487
        %v1280 = vmul.f32 %v1268, %v491
        %v1281 = vmul.f32 %v1264, %v495
        %v1282 = vmul.f32 %v1260, %v499
        %v1283 = vmul.f32 %v1273, %v487
        %v1284 = vmul.f32 %v1269, %v491
        %v1285 = vmul.f32 %v1265, %v495
        %v1286 = vmul.f32 %v1261, %v499
        %v1287 = vmul.f32 %v1274, %v487
        %v1288 = vmul.f32 %v1270, %v491
        %v1289 = vmul.f32 %v1266, %v495
        %v1290 = vmul.f32 %v1262, %v499
        %1291 = vrot.lane.b32.xlu0 %v1135, 15
        %v1292 = vpop.permute.xlu0 %1291
        %1293 = vrot.lane.b32.xlu0 %v1139, 15
        %v1294 = vpop.permute.xlu0 %1293
        %1295 = vrot.lane.b32.xlu0 %v1143, 15
        %v1296 = vpop.permute.xlu0 %1295
        %1297 = vrot.lane.b32.xlu0 %v1147, 15
        %v1298 = vpop.permute.xlu0 %1297
        %1299 = vrot.lane.b32.xlu0 %v1136, 15
        %v1300 = vpop.permute.xlu0 %1299
        %1301 = vrot.lane.b32.xlu0 %v1140, 15
        %v1302 = vpop.permute.xlu0 %1301
        %1303 = vrot.lane.b32.xlu0 %v1144, 15
        %v1304 = vpop.permute.xlu0 %1303
        %1305 = vrot.lane.b32.xlu0 %v1148, 15
        %v1306 = vpop.permute.xlu0 %1305
        %1307 = vrot.lane.b32.xlu0 %v1137, 15
        %v1308 = vpop.permute.xlu0 %1307
        %1309 = vrot.lane.b32.xlu0 %v1141, 15
        %v1310 = vpop.permute.xlu0 %1309
        %1311 = vrot.lane.b32.xlu0 %v1145, 15
        %v1312 = vpop.permute.xlu0 %1311
        %1313 = vrot.lane.b32.xlu0 %v1149, 15
        %v1314 = vpop.permute.xlu0 %1313
        %1315 = vrot.lane.b32.xlu0 %v1138, 15
        %v1316 = vpop.permute.xlu0 %1315
        %1317 = vrot.lane.b32.xlu0 %v1142, 15
        %v1318 = vpop.permute.xlu0 %1317
        %1319 = vrot.lane.b32.xlu0 %v1146, 15
        %v1320 = vpop.permute.xlu0 %1319
        %1321 = vrot.lane.b32.xlu0 %v1150, 15
        %v1322 = vpop.permute.xlu0 %1321
        %v1323 = vsel %vm516, %v1308, %v1316
        %v1324 = vsel %vm516, %v1310, %v1318
        %v1325 = vsel %vm516, %v1312, %v1320
        %v1326 = vsel %vm516, %v1314, %v1322
        %v1327 = vsel %vm516, %v1300, %v1308
        %v1328 = vsel %vm516, %v1302, %v1310
        %v1329 = vsel %vm516, %v1304, %v1312
        %v1330 = vsel %vm516, %v1306, %v1314
        %v1331 = vsel %vm516, %v1292, %v1300
        %v1332 = vsel %vm516, %v1294, %v1302
        %v1333 = vsel %vm516, %v1296, %v1304
        %v1334 = vsel %vm516, %v1298, %v1306
        %v1335 = vsel %vm516, %v1316, %v1292
        %v1336 = vsel %vm516, %v1318, %v1294
        %v1337 = vsel %vm516, %v1320, %v1296
        %v1338 = vsel %vm516, %v1322, %v1298
        %v1339 = vmul.f32 %v1335, %v527
        %v1340 = vmul.f32 %v1331, %v531
        %v1341 = vmul.f32 %v1327, %v535
        %v1342 = vmul.f32 %v1323, %v539
        %v1343 = vmul.f32 %v1336, %v527
        %v1344 = vmul.f32 %v1332, %v531
        %v1345 = vmul.f32 %v1328, %v535
        %v1346 = vmul.f32 %v1324, %v539
        %v1347 = vmul.f32 %v1337, %v527
        %v1348 = vmul.f32 %v1333, %v531
        %v1349 = vmul.f32 %v1329, %v535
        %v1350 = vmul.f32 %v1325, %v539
        %v1351 = vmul.f32 %v1338, %v527
        %v1352 = vmul.f32 %v1334, %v531
        %v1353 = vmul.f32 %v1330, %v535
        %v1354 = vmul.f32 %v1326, %v539
        %1355 = vrot.lane.b32.xlu0 %v1135, 1
        %v1356 = vpop.permute.xlu0 %1355
        %1357 = vrot.lane.b32.xlu0 %v1139, 1
        %v1358 = vpop.permute.xlu0 %1357
        %1359 = vrot.lane.b32.xlu0 %v1143, 1
        %v1360 = vpop.permute.xlu0 %1359
        %1361 = vrot.lane.b32.xlu0 %v1147, 1
        %v1362 = vpop.permute.xlu0 %1361
        %1363 = vrot.lane.b32.xlu0 %v1136, 1
        %v1364 = vpop.permute.xlu0 %1363
        %1365 = vrot.lane.b32.xlu0 %v1140, 1
        %v1366 = vpop.permute.xlu0 %1365
        %1367 = vrot.lane.b32.xlu0 %v1144, 1
        %v1368 = vpop.permute.xlu0 %1367
        %1369 = vrot.lane.b32.xlu0 %v1148, 1
        %v1370 = vpop.permute.xlu0 %1369
        %1371 = vrot.lane.b32.xlu0 %v1137, 1
        %v1372 = vpop.permute.xlu0 %1371
        %1373 = vrot.lane.b32.xlu0 %v1141, 1
        %v1374 = vpop.permute.xlu0 %1373
        %1375 = vrot.lane.b32.xlu0 %v1145, 1
        %v1376 = vpop.permute.xlu0 %1375
        %1377 = vrot.lane.b32.xlu0 %v1149, 1
        %v1378 = vpop.permute.xlu0 %1377
        %1379 = vrot.lane.b32.xlu0 %v1138, 1
        %v1380 = vpop.permute.xlu0 %1379
        %1381 = vrot.lane.b32.xlu0 %v1142, 1
        %v1382 = vpop.permute.xlu0 %1381
        %1383 = vrot.lane.b32.xlu0 %v1146, 1
        %v1384 = vpop.permute.xlu0 %1383
        %1385 = vrot.lane.b32.xlu0 %v1150, 1
        %v1386 = vpop.permute.xlu0 %1385
        %v1387 = vsel %vm556, %v1372, %v1380
        %v1388 = vsel %vm556, %v1374, %v1382
        %v1389 = vsel %vm556, %v1376, %v1384
        %v1390 = vsel %vm556, %v1378, %v1386
        %v1391 = vsel %vm556, %v1364, %v1372
        %v1392 = vsel %vm556, %v1366, %v1374
        %v1393 = vsel %vm556, %v1368, %v1376
        %v1394 = vsel %vm556, %v1370, %v1378
        %v1395 = vsel %vm556, %v1356, %v1364
        %v1396 = vsel %vm556, %v1358, %v1366
        %v1397 = vsel %vm556, %v1360, %v1368
        %v1398 = vsel %vm556, %v1362, %v1370
        %v1399 = vsel %vm556, %v1380, %v1356
        %v1400 = vsel %vm556, %v1382, %v1358
        %v1401 = vsel %vm556, %v1384, %v1360
        %v1402 = vsel %vm556, %v1386, %v1362
        %v1403 = vmul.f32 %v1399, %v567
        %v1404 = vmul.f32 %v1395, %v571
        %v1405 = vmul.f32 %v1391, %v575
        %v1406 = vmul.f32 %v1387, %v579
        %v1407 = vmul.f32 %v1400, %v567
        %v1408 = vmul.f32 %v1396, %v571
        %v1409 = vmul.f32 %v1392, %v575
        %v1410 = vmul.f32 %v1388, %v579
        %v1411 = vmul.f32 %v1401, %v567
        %v1412 = vmul.f32 %v1397, %v571
        %v1413 = vmul.f32 %v1393, %v575
        %v1414 = vmul.f32 %v1389, %v579
        %v1415 = vmul.f32 %v1402, %v567
        %v1416 = vmul.f32 %v1398, %v571
        %v1417 = vmul.f32 %v1394, %v575
        %v1418 = vmul.f32 %v1390, %v579
        %1419 = vrot.lane.b32.xlu0 %v1135, 127
        %v1420 = vpop.permute.xlu0 %1419
        %1421 = vrot.lane.b32.xlu0 %v1139, 127
        %v1422 = vpop.permute.xlu0 %1421
        %1423 = vrot.lane.b32.xlu0 %v1143, 127
        %v1424 = vpop.permute.xlu0 %1423
        %1425 = vrot.lane.b32.xlu0 %v1147, 127
        %v1426 = vpop.permute.xlu0 %1425
        %1427 = vrot.lane.b32.xlu0 %v1136, 127
        %v1428 = vpop.permute.xlu0 %1427
        %1429 = vrot.lane.b32.xlu0 %v1140, 127
        %v1430 = vpop.permute.xlu0 %1429
        %1431 = vrot.lane.b32.xlu0 %v1144, 127
        %v1432 = vpop.permute.xlu0 %1431
        %1433 = vrot.lane.b32.xlu0 %v1148, 127
        %v1434 = vpop.permute.xlu0 %1433
        %1435 = vrot.lane.b32.xlu0 %v1137, 127
        %v1436 = vpop.permute.xlu0 %1435
        %1437 = vrot.lane.b32.xlu0 %v1141, 127
        %v1438 = vpop.permute.xlu0 %1437
        %1439 = vrot.lane.b32.xlu0 %v1145, 127
        %v1440 = vpop.permute.xlu0 %1439
        %1441 = vrot.lane.b32.xlu0 %v1149, 127
        %v1442 = vpop.permute.xlu0 %1441
        %1443 = vrot.lane.b32.xlu0 %v1138, 127
        %v1444 = vpop.permute.xlu0 %1443
        %1445 = vrot.lane.b32.xlu0 %v1142, 127
        %v1446 = vpop.permute.xlu0 %1445
        %1447 = vrot.lane.b32.xlu0 %v1146, 127
        %v1448 = vpop.permute.xlu0 %1447
        %1449 = vrot.lane.b32.xlu0 %v1150, 127
        %v1450 = vpop.permute.xlu0 %1449
        %v1451 = vsel %vm596, %v1436, %v1444
        %v1452 = vsel %vm596, %v1438, %v1446
        %v1453 = vsel %vm596, %v1440, %v1448
        %v1454 = vsel %vm596, %v1442, %v1450
        %v1455 = vsel %vm596, %v1428, %v1436
        %v1456 = vsel %vm596, %v1430, %v1438
        %v1457 = vsel %vm596, %v1432, %v1440
        %v1458 = vsel %vm596, %v1434, %v1442
        %v1459 = vsel %vm596, %v1420, %v1428
        %v1460 = vsel %vm596, %v1422, %v1430
        %v1461 = vsel %vm596, %v1424, %v1432
        %v1462 = vsel %vm596, %v1426, %v1434
        %v1463 = vsel %vm596, %v1444, %v1420
        %v1464 = vsel %vm596, %v1446, %v1422
        %v1465 = vsel %vm596, %v1448, %v1424
        %v1466 = vsel %vm596, %v1450, %v1426
        %v1467 = vmul.f32 %v1459, %v607
        %v1468 = vmul.f32 %v1455, %v611
        %v1469 = vmul.f32 %v1451, %v615
        %v1470 = vmul.f32 %v1463, %v619
        %v1471 = vmul.f32 %v1460, %v607
        %v1472 = vmul.f32 %v1456, %v611
        %v1473 = vmul.f32 %v1452, %v615
        %v1474 = vmul.f32 %v1464, %v619
        %v1475 = vmul.f32 %v1461, %v607
        %v1476 = vmul.f32 %v1457, %v611
        %v1477 = vmul.f32 %v1453, %v615
        %v1478 = vmul.f32 %v1465, %v619
        %v1479 = vmul.f32 %v1462, %v607
        %v1480 = vmul.f32 %v1458, %v611
        %v1481 = vmul.f32 %v1454, %v615
        %v1482 = vmul.f32 %v1466, %v619
        %1483 = vrot.lane.b32.xlu0 %v1135, 113
        %v1484 = vpop.permute.xlu0 %1483
        %1485 = vrot.lane.b32.xlu0 %v1139, 113
        %v1486 = vpop.permute.xlu0 %1485
        %1487 = vrot.lane.b32.xlu0 %v1143, 113
        %v1488 = vpop.permute.xlu0 %1487
        %1489 = vrot.lane.b32.xlu0 %v1147, 113
        %v1490 = vpop.permute.xlu0 %1489
        %1491 = vrot.lane.b32.xlu0 %v1136, 113
        %v1492 = vpop.permute.xlu0 %1491
        %1493 = vrot.lane.b32.xlu0 %v1140, 113
        %v1494 = vpop.permute.xlu0 %1493
        %1495 = vrot.lane.b32.xlu0 %v1144, 113
        %v1496 = vpop.permute.xlu0 %1495
        %1497 = vrot.lane.b32.xlu0 %v1148, 113
        %v1498 = vpop.permute.xlu0 %1497
        %1499 = vrot.lane.b32.xlu0 %v1137, 113
        %v1500 = vpop.permute.xlu0 %1499
        %1501 = vrot.lane.b32.xlu0 %v1141, 113
        %v1502 = vpop.permute.xlu0 %1501
        %1503 = vrot.lane.b32.xlu0 %v1145, 113
        %v1504 = vpop.permute.xlu0 %1503
        %1505 = vrot.lane.b32.xlu0 %v1149, 113
        %v1506 = vpop.permute.xlu0 %1505
        %1507 = vrot.lane.b32.xlu0 %v1138, 113
        %v1508 = vpop.permute.xlu0 %1507
        %1509 = vrot.lane.b32.xlu0 %v1142, 113
        %v1510 = vpop.permute.xlu0 %1509
        %1511 = vrot.lane.b32.xlu0 %v1146, 113
        %v1512 = vpop.permute.xlu0 %1511
        %1513 = vrot.lane.b32.xlu0 %v1150, 113
        %v1514 = vpop.permute.xlu0 %1513
        %v1515 = vsel %vm636, %v1500, %v1508
        %v1516 = vsel %vm636, %v1502, %v1510
        %v1517 = vsel %vm636, %v1504, %v1512
        %v1518 = vsel %vm636, %v1506, %v1514
        %v1519 = vsel %vm636, %v1492, %v1500
        %v1520 = vsel %vm636, %v1494, %v1502
        %v1521 = vsel %vm636, %v1496, %v1504
        %v1522 = vsel %vm636, %v1498, %v1506
        %v1523 = vsel %vm636, %v1484, %v1492
        %v1524 = vsel %vm636, %v1486, %v1494
        %v1525 = vsel %vm636, %v1488, %v1496
        %v1526 = vsel %vm636, %v1490, %v1498
        %v1527 = vsel %vm636, %v1508, %v1484
        %v1528 = vsel %vm636, %v1510, %v1486
        %v1529 = vsel %vm636, %v1512, %v1488
        %v1530 = vsel %vm636, %v1514, %v1490
        %v1531 = vmul.f32 %v1523, %v647
        %v1532 = vmul.f32 %v1519, %v651
        %v1533 = vmul.f32 %v1515, %v655
        %v1534 = vmul.f32 %v1527, %v659
        %v1535 = vmul.f32 %v1524, %v647
        %v1536 = vmul.f32 %v1520, %v651
        %v1537 = vmul.f32 %v1516, %v655
        %v1538 = vmul.f32 %v1528, %v659
        %v1539 = vmul.f32 %v1525, %v647
        %v1540 = vmul.f32 %v1521, %v651
        %v1541 = vmul.f32 %v1517, %v655
        %v1542 = vmul.f32 %v1529, %v659
        %v1543 = vmul.f32 %v1526, %v647
        %v1544 = vmul.f32 %v1522, %v651
        %v1545 = vmul.f32 %v1518, %v655
        %v1546 = vmul.f32 %v1530, %v659
        %1547 = vrot.lane.b32.xlu0 %v1135, 112
        %v1548 = vpop.permute.xlu0 %1547
        %1549 = vrot.lane.b32.xlu0 %v1139, 112
        %v1550 = vpop.permute.xlu0 %1549
        %1551 = vrot.lane.b32.xlu0 %v1143, 112
        %v1552 = vpop.permute.xlu0 %1551
        %1553 = vrot.lane.b32.xlu0 %v1147, 112
        %v1554 = vpop.permute.xlu0 %1553
        %1555 = vrot.lane.b32.xlu0 %v1136, 112
        %v1556 = vpop.permute.xlu0 %1555
        %1557 = vrot.lane.b32.xlu0 %v1140, 112
        %v1558 = vpop.permute.xlu0 %1557
        %1559 = vrot.lane.b32.xlu0 %v1144, 112
        %v1560 = vpop.permute.xlu0 %1559
        %1561 = vrot.lane.b32.xlu0 %v1148, 112
        %v1562 = vpop.permute.xlu0 %1561
        %1563 = vrot.lane.b32.xlu0 %v1137, 112
        %v1564 = vpop.permute.xlu0 %1563
        %1565 = vrot.lane.b32.xlu0 %v1141, 112
        %v1566 = vpop.permute.xlu0 %1565
        %1567 = vrot.lane.b32.xlu0 %v1145, 112
        %v1568 = vpop.permute.xlu0 %1567
        %1569 = vrot.lane.b32.xlu0 %v1149, 112
        %v1570 = vpop.permute.xlu0 %1569
        %1571 = vrot.lane.b32.xlu0 %v1138, 112
        %v1572 = vpop.permute.xlu0 %1571
        %1573 = vrot.lane.b32.xlu0 %v1142, 112
        %v1574 = vpop.permute.xlu0 %1573
        %1575 = vrot.lane.b32.xlu0 %v1146, 112
        %v1576 = vpop.permute.xlu0 %1575
        %1577 = vrot.lane.b32.xlu0 %v1150, 112
        %v1578 = vpop.permute.xlu0 %1577
        %v1579 = vsel %vm676, %v1564, %v1572
        %v1580 = vsel %vm676, %v1566, %v1574
        %v1581 = vsel %vm676, %v1568, %v1576
        %v1582 = vsel %vm676, %v1570, %v1578
        %v1583 = vsel %vm676, %v1556, %v1564
        %v1584 = vsel %vm676, %v1558, %v1566
        %v1585 = vsel %vm676, %v1560, %v1568
        %v1586 = vsel %vm676, %v1562, %v1570
        %v1587 = vsel %vm676, %v1548, %v1556
        %v1588 = vsel %vm676, %v1550, %v1558
        %v1589 = vsel %vm676, %v1552, %v1560
        %v1590 = vsel %vm676, %v1554, %v1562
        %v1591 = vsel %vm676, %v1572, %v1548
        %v1592 = vsel %vm676, %v1574, %v1550
        %v1593 = vsel %vm676, %v1576, %v1552
        %v1594 = vsel %vm676, %v1578, %v1554
        %v1595 = vmul.f32 %v1587, %v687
        %v1596 = vmul.f32 %v1583, %v691
        %v1597 = vmul.f32 %v1579, %v695
        %v1598 = vmul.f32 %v1591, %v699
        %v1599 = vmul.f32 %v1588, %v687
        %v1600 = vmul.f32 %v1584, %v691
        %v1601 = vmul.f32 %v1580, %v695
        %v1602 = vmul.f32 %v1592, %v699
        %v1603 = vmul.f32 %v1589, %v687
        %v1604 = vmul.f32 %v1585, %v691
        %v1605 = vmul.f32 %v1581, %v695
        %v1606 = vmul.f32 %v1593, %v699
        %v1607 = vmul.f32 %v1590, %v687
        %v1608 = vmul.f32 %v1586, %v691
        %v1609 = vmul.f32 %v1582, %v695
        %v1610 = vmul.f32 %v1594, %v699
        %1611 = vrot.lane.b32.xlu0 %v1135, 111
        %v1612 = vpop.permute.xlu0 %1611
        %1613 = vrot.lane.b32.xlu0 %v1139, 111
        %v1614 = vpop.permute.xlu0 %1613
        %1615 = vrot.lane.b32.xlu0 %v1143, 111
        %v1616 = vpop.permute.xlu0 %1615
        %1617 = vrot.lane.b32.xlu0 %v1147, 111
        %v1618 = vpop.permute.xlu0 %1617
        %1619 = vrot.lane.b32.xlu0 %v1136, 111
        %v1620 = vpop.permute.xlu0 %1619
        %1621 = vrot.lane.b32.xlu0 %v1140, 111
        %v1622 = vpop.permute.xlu0 %1621
        %1623 = vrot.lane.b32.xlu0 %v1144, 111
        %v1624 = vpop.permute.xlu0 %1623
        %1625 = vrot.lane.b32.xlu0 %v1148, 111
        %v1626 = vpop.permute.xlu0 %1625
        %1627 = vrot.lane.b32.xlu0 %v1137, 111
        %v1628 = vpop.permute.xlu0 %1627
        %1629 = vrot.lane.b32.xlu0 %v1141, 111
        %v1630 = vpop.permute.xlu0 %1629
        %1631 = vrot.lane.b32.xlu0 %v1145, 111
        %v1632 = vpop.permute.xlu0 %1631
        %1633 = vrot.lane.b32.xlu0 %v1149, 111
        %v1634 = vpop.permute.xlu0 %1633
        %1635 = vrot.lane.b32.xlu0 %v1138, 111
        %v1636 = vpop.permute.xlu0 %1635
        %1637 = vrot.lane.b32.xlu0 %v1142, 111
        %v1638 = vpop.permute.xlu0 %1637
        %1639 = vrot.lane.b32.xlu0 %v1146, 111
        %v1640 = vpop.permute.xlu0 %1639
        %1641 = vrot.lane.b32.xlu0 %v1150, 111
        %v1642 = vpop.permute.xlu0 %1641
        %v1643 = vsel %vm716, %v1628, %v1636
        %v1644 = vsel %vm716, %v1630, %v1638
        %v1645 = vsel %vm716, %v1632, %v1640
        %v1646 = vsel %vm716, %v1634, %v1642
        %v1647 = vsel %vm716, %v1620, %v1628
        %v1648 = vsel %vm716, %v1622, %v1630
        %v1649 = vsel %vm716, %v1624, %v1632
        %v1650 = vsel %vm716, %v1626, %v1634
        %v1651 = vsel %vm716, %v1612, %v1620
        %v1652 = vsel %vm716, %v1614, %v1622
        %v1653 = vsel %vm716, %v1616, %v1624
        %v1654 = vsel %vm716, %v1618, %v1626
        %v1655 = vsel %vm716, %v1636, %v1612
        %v1656 = vsel %vm716, %v1638, %v1614
        %v1657 = vsel %vm716, %v1640, %v1616
        %v1658 = vsel %vm716, %v1642, %v1618
        %v1659 = vmul.f32 %v1651, %v727
        %v1660 = vmul.f32 %v1647, %v731
        %v1661 = vmul.f32 %v1643, %v735
        %v1662 = vmul.f32 %v1655, %v739
        %v1663 = vmul.f32 %v1652, %v727
        %v1664 = vmul.f32 %v1648, %v731
        %v1665 = vmul.f32 %v1644, %v735
        %v1666 = vmul.f32 %v1656, %v739
        %v1667 = vmul.f32 %v1653, %v727
        %v1668 = vmul.f32 %v1649, %v731
        %v1669 = vmul.f32 %v1645, %v735
        %v1670 = vmul.f32 %v1657, %v739
        %v1671 = vmul.f32 %v1654, %v727
        %v1672 = vmul.f32 %v1650, %v731
        %v1673 = vmul.f32 %v1646, %v735
        %v1674 = vmul.f32 %v1658, %v739
        %v1675 = vld [vmem:[%s407] sm:$0xff]
        %v1676 = vld [vmem:[%s407 + $0x8] sm:$0xff]
        %v1677 = vld [vmem:[%s407 + $0x10] sm:$0xff]
        %v1678 = vld [vmem:[%s407 + $0x18] sm:$0xff]
        %v1679 = vld [vmem:[%s412] sm:$0xff]
        %v1680 = vld [vmem:[%s412 + $0x8] sm:$0xff]
        %v1681 = vld [vmem:[%s412 + $0x10] sm:$0xff]
        %v1682 = vld [vmem:[%s412 + $0x18] sm:$0xff]
        %v1683 = vld [vmem:[%s417] sm:$0xff]
        %v1684 = vld [vmem:[%s417 + $0x8] sm:$0xff]
        %v1685 = vld [vmem:[%s417 + $0x10] sm:$0xff]
        %v1686 = vld [vmem:[%s417 + $0x18] sm:$0xff]
        %1688 = vset.pattern.permute.xlu0 0
        %1689 = vperm.xlu0 %1688, %v1675
        %v1690 = vpop.permute.xlu0 %1689
        %1693 = vset.pattern.permute.xlu0 0
        %1694 = vperm.xlu0 %1693, %v1676
        %v1695 = vpop.permute.xlu0 %1694
        %1698 = vset.pattern.permute.xlu0 0
        %1699 = vperm.xlu0 %1698, %v1677
        %v1700 = vpop.permute.xlu0 %1699
        %1703 = vset.pattern.permute.xlu0 0
        %1704 = vperm.xlu0 %1703, %v1678
        %v1705 = vpop.permute.xlu0 %1704
        %vm1707 = vcmask 261120
        %v1709 = vsel %vm1707, %v1153, 0
        %v1712 = vsel %vm1707, %v1156, 0
        %v1715 = vsel %vm1707, %v1159, 0
        %v1718 = vsel %vm1707, %v1162, 0
        %1720 = vmatprep.subr.mxu0 %v1416
        %1721 = vmatpush1.msra.mxu0 %v1415
        %1722 = vmatprep.subr.mxu0 %v1412
        %1723 = vmatpush1.msra.mxu0 %v1411
        %1724 = vmatprep.subr.mxu0 %v1408
        %1725 = vmatpush1.msra.mxu0 %v1407
        %1726 = vmatprep.subr.mxu0 %v1404
        %1727 = vmatpush1.msra.mxu0 %v1403
        %1728 = vmatprep.subr.mxu0 %v1352
        %1729 = vmatpush1.msra.mxu0 %v1351
        %1730 = vmatprep.subr.mxu0 %v1348
        %1731 = vmatpush1.msra.mxu0 %v1347
        %1732 = vmatprep.subr.mxu0 %v1344
        %1733 = vmatpush1.msra.mxu0 %v1343
        %1734 = vmatprep.subr.mxu0 %v1340
        %1735 = vmatpush1.msra.mxu0 %v1339
        %1736 = vmatprep.subr.mxu0 %v1288
        %1737 = vmatpush1.msra.mxu0 %v1287
        %1738 = vmatprep.subr.mxu0 %v1284
        %1739 = vmatpush1.msra.mxu0 %v1283
        %1740 = vmatprep.subr.mxu0 %v1280
        %1741 = vmatpush1.msra.mxu0 %v1279
        %1742 = vmatprep.subr.mxu0 %v1276
        %1743 = vmatpush1.msra.mxu0 %v1275
        %1744 = vmatprep.subr.mxu0 %v1224
        %1745 = vmatpush1.msra.mxu0 %v1223
        %1746 = vmatprep.subr.mxu0 %v1220
        %1747 = vmatpush1.msra.mxu0 %v1219
        %1748 = vmatprep.subr.mxu0 %v1216
        %1749 = vmatpush1.msra.mxu0 %v1215
        %1750 = vmatprep.subr.mxu0 %v1212
        %1751 = vmatpush1.msra.mxu0 %v1211
        %1752 = vmatprep.subr.mxu0 %v1608
        %1753 = vmatpush2.msra.mxu0 %v1607
        %1754 = vmatprep.subr.mxu0 %v1604
        %1755 = vmatpush2.msra.mxu0 %v1603
        %1756 = vmatprep.subr.mxu0 %v1600
        %1757 = vmatpush2.msra.mxu0 %v1599
        %1758 = vmatprep.subr.mxu0 %v1596
        %1759 = vmatpush2.msra.mxu0 %v1595
        %1760 = vmatprep.subr.mxu0 %v1544
        %1761 = vmatpush2.msra.mxu0 %v1543
        %1762 = vmatprep.subr.mxu0 %v1540
        %1763 = vmatpush2.msra.mxu0 %v1539
        %1764 = vmatprep.subr.mxu0 %v1536
        %1765 = vmatpush2.msra.mxu0 %v1535
        %1766 = vmatprep.subr.mxu0 %v1532
        %1767 = vmatpush2.msra.mxu0 %v1531
        %1768 = vmatprep.subr.mxu0 %v1480
        %1769 = vmatpush2.msra.mxu0 %v1479
        %1770 = vmatprep.subr.mxu0 %v1476
        %1771 = vmatpush2.msra.mxu0 %v1475
        %1772 = vmatprep.subr.mxu0 %v1472
        %1773 = vmatpush2.msra.mxu0 %v1471
        %1774 = vmatprep.subr.mxu0 %v1468
        %1775 = vmatpush2.msra.mxu0 %v1467
        %1776 = vmatprep.subr.mxu0 %v1148
        %1777 = vmatpush2.msra.mxu0 %v1147
        %1778 = vmatprep.subr.mxu0 %v1144
        %1779 = vmatpush2.msra.mxu0 %v1143
        %1780 = vmatprep.subr.mxu0 %v1140
        %1781 = vmatpush2.msra.mxu0 %v1139
        %1782 = vmatprep.subr.mxu0 %v1136
        %1783 = vmatpush2.msra.mxu0 %v1135
        %1784 = vmatprep.mubr.f32.mxu0 %v1152
        %1785 = vmatmul.mubr.f32.gmra.mxu0 %v1151
        %v1786 = vpop.f32.mrf.mxu0
        %v1787 = vadd.f32 %v1690, %v1786
        %v1788 = vpop.f32.mrf.mxu0
        %v1789 = vadd.f32 %v1690, %v1788
        %1790 = vmatprep.mubr.f32.mxu0 %v1155
        %1791 = vmatmul.mubr.f32.gmra.mxu0 %v1154
        %v1792 = vpop.f32.mrf.mxu0
        %v1793 = vadd.f32 %v1695, %v1792
        %v1794 = vpop.f32.mrf.mxu0
        %v1795 = vadd.f32 %v1695, %v1794
        %1796 = vmatprep.mubr.f32.mxu0 %v1158
        %1797 = vmatmul.mubr.f32.gmra.mxu0 %v1157
        %v1798 = vpop.f32.mrf.mxu0
        %v1799 = vadd.f32 %v1700, %v1798
        %v1800 = vpop.f32.mrf.mxu0
        %v1801 = vadd.f32 %v1700, %v1800
        %1802 = vmatprep.mubr.f32.mxu0 %v1161
        %1803 = vmatmul.mubr.f32.gmra.mxu0 %v1160
        %v1804 = vpop.f32.mrf.mxu0
        %v1805 = vadd.f32 %v1705, %v1804
        %v1806 = vpop.f32.mrf.mxu0
        %v1807 = vadd.f32 %v1705, %v1806
        %1808 = vdwg.mxu0
        %1809 = vmatprep.subr.mxu0 0.0
        %1810 = vmatpush1.msra.mxu0 0.0
        %1811 = vmatprep.subr.mxu0 0.0
        %1812 = vmatpush1.msra.mxu0 0.0
        %1813 = vmatprep.subr.mxu0 0.0
        %1814 = vmatpush1.msra.mxu0 0.0
        %1815 = vmatprep.subr.mxu0 0.0
        %1816 = vmatpush1.msra.mxu0 0.0
        %1817 = vmatprep.subr.mxu0 0.0
        %1818 = vmatpush1.msra.mxu0 0.0
        %1819 = vmatprep.subr.mxu0 0.0
        %1820 = vmatpush1.msra.mxu0 0.0
        %1821 = vmatprep.subr.mxu0 0.0
        %1822 = vmatpush1.msra.mxu0 0.0
        %1823 = vmatprep.subr.mxu0 0.0
        %1824 = vmatpush1.msra.mxu0 0.0
        %1825 = vmatprep.subr.mxu0 0.0
        %1826 = vmatpush1.msra.mxu0 0.0
        %1827 = vmatprep.subr.mxu0 0.0
        %1828 = vmatpush1.msra.mxu0 0.0
        %1829 = vmatprep.subr.mxu0 0.0
        %1830 = vmatpush1.msra.mxu0 0.0
        %1831 = vmatprep.subr.mxu0 0.0
        %1832 = vmatpush1.msra.mxu0 0.0
        %1833 = vmatprep.subr.mxu0 %v1672
        %1834 = vmatpush1.msra.mxu0 %v1671
        %1835 = vmatprep.subr.mxu0 %v1668
        %1836 = vmatpush1.msra.mxu0 %v1667
        %1837 = vmatprep.subr.mxu0 %v1664
        %1838 = vmatpush1.msra.mxu0 %v1663
        %1839 = vmatprep.subr.mxu0 %v1660
        %1840 = vmatpush1.msra.mxu0 %v1659
        %1841 = vmatprep.subr.mxu0 0.0
        %1842 = vmatpush2.msra.mxu0 0.0
        %1843 = vmatprep.subr.mxu0 0.0
        %1844 = vmatpush2.msra.mxu0 0.0
        %1845 = vmatprep.subr.mxu0 0.0
        %1846 = vmatpush2.msra.mxu0 0.0
        %1847 = vmatprep.subr.mxu0 0.0
        %1848 = vmatpush2.msra.mxu0 0.0
        %1849 = vmatprep.subr.mxu0 0.0
        %1850 = vmatpush2.msra.mxu0 0.0
        %1851 = vmatprep.subr.mxu0 0.0
        %1852 = vmatpush2.msra.mxu0 0.0
        %1853 = vmatprep.subr.mxu0 0.0
        %1854 = vmatpush2.msra.mxu0 0.0
        %1855 = vmatprep.subr.mxu0 0.0
        %1856 = vmatpush2.msra.mxu0 0.0
        %1857 = vmatprep.subr.mxu0 0.0
        %1858 = vmatpush2.msra.mxu0 0.0
        %1859 = vmatprep.subr.mxu0 0.0
        %1860 = vmatpush2.msra.mxu0 0.0
        %1861 = vmatprep.subr.mxu0 0.0
        %1862 = vmatpush2.msra.mxu0 0.0
        %1863 = vmatprep.subr.mxu0 0.0
        %1864 = vmatpush2.msra.mxu0 0.0
        %1865 = vmatprep.subr.mxu0 0.0
        %1866 = vmatpush2.msra.mxu0 0.0
        %1867 = vmatprep.subr.mxu0 0.0
        %1868 = vmatpush2.msra.mxu0 0.0
        %1869 = vmatprep.subr.mxu0 0.0
        %1870 = vmatpush2.msra.mxu0 0.0
        %1871 = vmatprep.subr.mxu0 0.0
        %1872 = vmatpush2.msra.mxu0 0.0
        %1873 = vmatprep.mubr.f32.mxu0 0.0
        %1874 = vmatmul.mubr.f32.gmra.mxu0 %v1709
        %v1875 = vpop.f32.mrf.mxu0
        %v1876 = vadd.f32 %v1787, %v1875
        %v1877 = vpop.f32.mrf.mxu0
        %v1878 = vadd.f32 %v1789, %v1877
        %1879 = vmatprep.mubr.f32.mxu0 0.0
        %1880 = vmatmul.mubr.f32.gmra.mxu0 %v1712
        %v1881 = vpop.f32.mrf.mxu0
        %v1882 = vadd.f32 %v1793, %v1881
        %v1883 = vpop.f32.mrf.mxu0
        %v1884 = vadd.f32 %v1795, %v1883
        %1885 = vmatprep.mubr.f32.mxu0 0.0
        %1886 = vmatmul.mubr.f32.gmra.mxu0 %v1715
        %v1887 = vpop.f32.mrf.mxu0
        %v1888 = vadd.f32 %v1799, %v1887
        %v1889 = vpop.f32.mrf.mxu0
        %v1890 = vadd.f32 %v1801, %v1889
        %1891 = vmatprep.mubr.f32.mxu0 0.0
        %1892 = vmatmul.mubr.f32.gmra.mxu0 %v1718
        %v1893 = vpop.f32.mrf.mxu0
        %v1894 = vadd.f32 %v1805, %v1893
        %v1895 = vpop.f32.mrf.mxu0
        %v1896 = vadd.f32 %v1807, %v1895
        %1897 = vdwg.mxu0
        %1898 = vmatprep.subr.mxu0 %v1418
        %1899 = vmatpush1.msra.mxu0 %v1417
        %1900 = vmatprep.subr.mxu0 %v1414
        %1901 = vmatpush1.msra.mxu0 %v1413
        %1902 = vmatprep.subr.mxu0 %v1410
        %1903 = vmatpush1.msra.mxu0 %v1409
        %1904 = vmatprep.subr.mxu0 %v1406
        %1905 = vmatpush1.msra.mxu0 %v1405
        %1906 = vmatprep.subr.mxu0 %v1354
        %1907 = vmatpush1.msra.mxu0 %v1353
        %1908 = vmatprep.subr.mxu0 %v1350
        %1909 = vmatpush1.msra.mxu0 %v1349
        %1910 = vmatprep.subr.mxu0 %v1346
        %1911 = vmatpush1.msra.mxu0 %v1345
        %1912 = vmatprep.subr.mxu0 %v1342
        %1913 = vmatpush1.msra.mxu0 %v1341
        %1914 = vmatprep.subr.mxu0 %v1290
        %1915 = vmatpush1.msra.mxu0 %v1289
        %1916 = vmatprep.subr.mxu0 %v1286
        %1917 = vmatpush1.msra.mxu0 %v1285
        %1918 = vmatprep.subr.mxu0 %v1282
        %1919 = vmatpush1.msra.mxu0 %v1281
        %1920 = vmatprep.subr.mxu0 %v1278
        %1921 = vmatpush1.msra.mxu0 %v1277
        %1922 = vmatprep.subr.mxu0 %v1226
        %1923 = vmatpush1.msra.mxu0 %v1225
        %1924 = vmatprep.subr.mxu0 %v1222
        %1925 = vmatpush1.msra.mxu0 %v1221
        %1926 = vmatprep.subr.mxu0 %v1218
        %1927 = vmatpush1.msra.mxu0 %v1217
        %1928 = vmatprep.subr.mxu0 %v1214
        %1929 = vmatpush1.msra.mxu0 %v1213
        %1930 = vmatprep.subr.mxu0 %v1610
        %1931 = vmatpush2.msra.mxu0 %v1609
        %1932 = vmatprep.subr.mxu0 %v1606
        %1933 = vmatpush2.msra.mxu0 %v1605
        %1934 = vmatprep.subr.mxu0 %v1602
        %1935 = vmatpush2.msra.mxu0 %v1601
        %1936 = vmatprep.subr.mxu0 %v1598
        %1937 = vmatpush2.msra.mxu0 %v1597
        %1938 = vmatprep.subr.mxu0 %v1546
        %1939 = vmatpush2.msra.mxu0 %v1545
        %1940 = vmatprep.subr.mxu0 %v1542
        %1941 = vmatpush2.msra.mxu0 %v1541
        %1942 = vmatprep.subr.mxu0 %v1538
        %1943 = vmatpush2.msra.mxu0 %v1537
        %1944 = vmatprep.subr.mxu0 %v1534
        %1945 = vmatpush2.msra.mxu0 %v1533
        %1946 = vmatprep.subr.mxu0 %v1482
        %1947 = vmatpush2.msra.mxu0 %v1481
        %1948 = vmatprep.subr.mxu0 %v1478
        %1949 = vmatpush2.msra.mxu0 %v1477
        %1950 = vmatprep.subr.mxu0 %v1474
        %1951 = vmatpush2.msra.mxu0 %v1473
        %1952 = vmatprep.subr.mxu0 %v1470
        %1953 = vmatpush2.msra.mxu0 %v1469
        %1954 = vmatprep.subr.mxu0 %v1150
        %1955 = vmatpush2.msra.mxu0 %v1149
        %1956 = vmatprep.subr.mxu0 %v1146
        %1957 = vmatpush2.msra.mxu0 %v1145
        %1958 = vmatprep.subr.mxu0 %v1142
        %1959 = vmatpush2.msra.mxu0 %v1141
        %1960 = vmatprep.subr.mxu0 %v1138
        %1961 = vmatpush2.msra.mxu0 %v1137
        %1962 = vmatprep.mubr.f32.mxu0 %v1152
        %1963 = vmatmul.mubr.f32.gmra.mxu0 %v1151
        %v1964 = vpop.f32.mrf.mxu0
        %v1965 = vadd.f32 %v1690, %v1964
        %v1966 = vpop.f32.mrf.mxu0
        %v1967 = vadd.f32 %v1690, %v1966
        %1968 = vmatprep.mubr.f32.mxu0 %v1155
        %1969 = vmatmul.mubr.f32.gmra.mxu0 %v1154
        %v1970 = vpop.f32.mrf.mxu0
        %v1971 = vadd.f32 %v1695, %v1970
        %v1972 = vpop.f32.mrf.mxu0
        %v1973 = vadd.f32 %v1695, %v1972
        %1974 = vmatprep.mubr.f32.mxu0 %v1158
        %1975 = vmatmul.mubr.f32.gmra.mxu0 %v1157
        %v1976 = vpop.f32.mrf.mxu0
        %v1977 = vadd.f32 %v1700, %v1976
        %v1978 = vpop.f32.mrf.mxu0
        %v1979 = vadd.f32 %v1700, %v1978
        %1980 = vmatprep.mubr.f32.mxu0 %v1161
        %1981 = vmatmul.mubr.f32.gmra.mxu0 %v1160
        %v1982 = vpop.f32.mrf.mxu0
        %v1983 = vadd.f32 %v1705, %v1982
        %v1984 = vpop.f32.mrf.mxu0
        %v1985 = vadd.f32 %v1705, %v1984
        %1986 = vdwg.mxu0
        %1987 = vmatprep.subr.mxu0 0.0
        %1988 = vmatpush1.msra.mxu0 0.0
        %1989 = vmatprep.subr.mxu0 0.0
        %1990 = vmatpush1.msra.mxu0 0.0
        %1991 = vmatprep.subr.mxu0 0.0
        %1992 = vmatpush1.msra.mxu0 0.0
        %1993 = vmatprep.subr.mxu0 0.0
        %1994 = vmatpush1.msra.mxu0 0.0
        %1995 = vmatprep.subr.mxu0 0.0
        %1996 = vmatpush1.msra.mxu0 0.0
        %1997 = vmatprep.subr.mxu0 0.0
        %1998 = vmatpush1.msra.mxu0 0.0
        %1999 = vmatprep.subr.mxu0 0.0
        %2000 = vmatpush1.msra.mxu0 0.0
        %2001 = vmatprep.subr.mxu0 0.0
        %2002 = vmatpush1.msra.mxu0 0.0
        %2003 = vmatprep.subr.mxu0 0.0
        %2004 = vmatpush1.msra.mxu0 0.0
        %2005 = vmatprep.subr.mxu0 0.0
        %2006 = vmatpush1.msra.mxu0 0.0
        %2007 = vmatprep.subr.mxu0 0.0
        %2008 = vmatpush1.msra.mxu0 0.0
        %2009 = vmatprep.subr.mxu0 0.0
        %2010 = vmatpush1.msra.mxu0 0.0
        %2011 = vmatprep.subr.mxu0 %v1674
        %2012 = vmatpush1.msra.mxu0 %v1673
        %2013 = vmatprep.subr.mxu0 %v1670
        %2014 = vmatpush1.msra.mxu0 %v1669
        %2015 = vmatprep.subr.mxu0 %v1666
        %2016 = vmatpush1.msra.mxu0 %v1665
        %2017 = vmatprep.subr.mxu0 %v1662
        %2018 = vmatpush1.msra.mxu0 %v1661
        %2019 = vmatprep.subr.mxu0 0.0
        %2020 = vmatpush2.msra.mxu0 0.0
        %2021 = vmatprep.subr.mxu0 0.0
        %2022 = vmatpush2.msra.mxu0 0.0
        %2023 = vmatprep.subr.mxu0 0.0
        %2024 = vmatpush2.msra.mxu0 0.0
        %2025 = vmatprep.subr.mxu0 0.0
        %2026 = vmatpush2.msra.mxu0 0.0
        %2027 = vmatprep.subr.mxu0 0.0
        %2028 = vmatpush2.msra.mxu0 0.0
        %2029 = vmatprep.subr.mxu0 0.0
        %2030 = vmatpush2.msra.mxu0 0.0
        %2031 = vmatprep.subr.mxu0 0.0
        %2032 = vmatpush2.msra.mxu0 0.0
        %2033 = vmatprep.subr.mxu0 0.0
        %2034 = vmatpush2.msra.mxu0 0.0
        %2035 = vmatprep.subr.mxu0 0.0
        %2036 = vmatpush2.msra.mxu0 0.0
        %2037 = vmatprep.subr.mxu0 0.0
        %2038 = vmatpush2.msra.mxu0 0.0
        %2039 = vmatprep.subr.mxu0 0.0
        %2040 = vmatpush2.msra.mxu0 0.0
        %2041 = vmatprep.subr.mxu0 0.0
        %2042 = vmatpush2.msra.mxu0 0.0
        %2043 = vmatprep.subr.mxu0 0.0
        %2044 = vmatpush2.msra.mxu0 0.0
        %2045 = vmatprep.subr.mxu0 0.0
        %2046 = vmatpush2.msra.mxu0 0.0
        %2047 = vmatprep.subr.mxu0 0.0
        %2048 = vmatpush2.msra.mxu0 0.0
        %2049 = vmatprep.subr.mxu0 0.0
        %2050 = vmatpush2.msra.mxu0 0.0
        %2051 = vmatprep.mubr.f32.mxu0 0.0
        %2052 = vmatmul.mubr.f32.gmra.mxu0 %v1709
        %v2053 = vpop.f32.mrf.mxu0
        %v2054 = vadd.f32 %v1965, %v2053
        %v2055 = vpop.f32.mrf.mxu0
        %v2056 = vadd.f32 %v1967, %v2055
        %2057 = vmatprep.mubr.f32.mxu0 0.0
        %2058 = vmatmul.mubr.f32.gmra.mxu0 %v1712
        %v2059 = vpop.f32.mrf.mxu0
        %v2060 = vadd.f32 %v1971, %v2059
        %v2061 = vpop.f32.mrf.mxu0
        %v2062 = vadd.f32 %v1973, %v2061
        %2063 = vmatprep.mubr.f32.mxu0 0.0
        %2064 = vmatmul.mubr.f32.gmra.mxu0 %v1715
        %v2065 = vpop.f32.mrf.mxu0
        %v2066 = vadd.f32 %v1977, %v2065
        %v2067 = vpop.f32.mrf.mxu0
        %v2068 = vadd.f32 %v1979, %v2067
        %2069 = vmatprep.mubr.f32.mxu0 0.0
        %2070 = vmatmul.mubr.f32.gmra.mxu0 %v1718
        %v2071 = vpop.f32.mrf.mxu0
        %v2072 = vadd.f32 %v1983, %v2071
        %v2073 = vpop.f32.mrf.mxu0
        %v2074 = vadd.f32 %v1985, %v2073
        %2075 = vdwg.mxu0
        %v2076 = vmax.f32 %v1876, 0.0
        %v2077 = vmax.f32 %v1878, 0.0
        %v2078 = vmax.f32 %v2054, 0.0
        %v2079 = vmax.f32 %v2056, 0.0
        %v2080 = vmax.f32 %v1882, 0.0
        %v2081 = vmax.f32 %v1884, 0.0
        %v2082 = vmax.f32 %v2060, 0.0
        %v2083 = vmax.f32 %v2062, 0.0
        %v2084 = vmax.f32 %v1888, 0.0
        %v2085 = vmax.f32 %v1890, 0.0
        %v2086 = vmax.f32 %v2066, 0.0
        %v2087 = vmax.f32 %v2068, 0.0
        %v2088 = vmax.f32 %v1894, 0.0
        %v2089 = vmax.f32 %v1896, 0.0
        %v2090 = vmax.f32 %v2072, 0.0
        %v2091 = vmax.f32 %v2074, 0.0
        %v2092 = vadd.f32 %v2076, %v2077
        %v2093 = vadd.f32 %v2092, %v2078
        %v2094 = vadd.f32 %v2093, %v2079
        %2095 = vadd.xlane.f32.xlu0 %v2094
        %v2096 = vpop.xlane.xlu0 %2095
        %v2097 = vadd.f32 %v2080, %v2081
        %v2098 = vadd.f32 %v2097, %v2082
        %v2099 = vadd.f32 %v2098, %v2083
        %2100 = vadd.xlane.f32.xlu0 %v2099
        %v2101 = vpop.xlane.xlu0 %2100
        %v2102 = vadd.f32 %v2084, %v2085
        %v2103 = vadd.f32 %v2102, %v2086
        %v2104 = vadd.f32 %v2103, %v2087
        %2105 = vadd.xlane.f32.xlu0 %v2104
        %v2106 = vpop.xlane.xlu0 %2105
        %v2107 = vadd.f32 %v2088, %v2089
        %v2108 = vadd.f32 %v2107, %v2090
        %v2109 = vadd.f32 %v2108, %v2091
        %2110 = vadd.xlane.f32.xlu0 %v2109
        %v2111 = vpop.xlane.xlu0 %2110
        %v2112 = vmul.f32 %v2096, 0.001953125
        %v2113 = vmul.f32 %v2101, 0.001953125
        %v2114 = vmul.f32 %v2106, 0.001953125
        %v2115 = vmul.f32 %v2111, 0.001953125
        %v2116 = vmul.f32 %v2076, %v2076
        %v2117 = vmul.f32 %v2077, %v2077
        %v2118 = vmul.f32 %v2078, %v2078
        %v2119 = vmul.f32 %v2079, %v2079
        %v2120 = vmul.f32 %v2080, %v2080
        %v2121 = vmul.f32 %v2081, %v2081
        %v2122 = vmul.f32 %v2082, %v2082
        %v2123 = vmul.f32 %v2083, %v2083
        %v2124 = vmul.f32 %v2084, %v2084
        %v2125 = vmul.f32 %v2085, %v2085
        %v2126 = vmul.f32 %v2086, %v2086
        %v2127 = vmul.f32 %v2087, %v2087
        %v2128 = vmul.f32 %v2088, %v2088
        %v2129 = vmul.f32 %v2089, %v2089
        %v2130 = vmul.f32 %v2090, %v2090
        %v2131 = vmul.f32 %v2091, %v2091
        %v2132 = vadd.f32 %v2116, %v2117
        %v2133 = vadd.f32 %v2132, %v2118
        %v2134 = vadd.f32 %v2133, %v2119
        %2135 = vadd.xlane.f32.xlu0 %v2134
        %v2136 = vpop.xlane.xlu0 %2135
        %v2137 = vadd.f32 %v2120, %v2121
        %v2138 = vadd.f32 %v2137, %v2122
        %v2139 = vadd.f32 %v2138, %v2123
        %2140 = vadd.xlane.f32.xlu0 %v2139
        %v2141 = vpop.xlane.xlu0 %2140
        %v2142 = vadd.f32 %v2124, %v2125
        %v2143 = vadd.f32 %v2142, %v2126
        %v2144 = vadd.f32 %v2143, %v2127
        %2145 = vadd.xlane.f32.xlu0 %v2144
        %v2146 = vpop.xlane.xlu0 %2145
        %v2147 = vadd.f32 %v2128, %v2129
        %v2148 = vadd.f32 %v2147, %v2130
        %v2149 = vadd.f32 %v2148, %v2131
        %2150 = vadd.xlane.f32.xlu0 %v2149
        %v2151 = vpop.xlane.xlu0 %2150
        %v2152 = vmul.f32 %v2136, 0.001953125
        %v2153 = vmul.f32 %v2141, 0.001953125
        %v2154 = vmul.f32 %v2146, 0.001953125
        %v2155 = vmul.f32 %v2151, 0.001953125
        %v2156 = vmul.f32 %v2112, %v2112
        %v2157 = vmul.f32 %v2113, %v2113
        %v2158 = vmul.f32 %v2114, %v2114
        %v2159 = vmul.f32 %v2115, %v2115
        %v2160 = vsub.f32 %v2152, %v2156
        %v2161 = vsub.f32 %v2153, %v2157
        %v2162 = vsub.f32 %v2154, %v2158
        %v2163 = vsub.f32 %v2155, %v2159
        %v2164 = vadd.f32 %v2160, 1e-05
        %v2165 = vadd.f32 %v2161, 1e-05
        %v2166 = vadd.f32 %v2162, 1e-05
        %v2167 = vadd.f32 %v2163, 1e-05
        %v2168 = vrsqrt.pop %v2164
        %v2169 = vrsqrt.pop %v2165
        %v2170 = vrsqrt.pop %v2166
        %v2171 = vrsqrt.pop %v2167
        %v2172 = vmul.f32 %v1679, %v2168
        %v2173 = vmul.f32 %v1680, %v2169
        %v2174 = vmul.f32 %v1681, %v2170
        %v2175 = vmul.f32 %v1682, %v2171
        %v2176 = vmul.f32 %v2112, %v2172
        %v2177 = vmul.f32 %v2113, %v2173
        %v2178 = vmul.f32 %v2114, %v2174
        %v2179 = vmul.f32 %v2115, %v2175
        %v2180 = vsub.f32 %v1683, %v2176
        %v2181 = vsub.f32 %v1684, %v2177
        %v2182 = vsub.f32 %v1685, %v2178
        %v2183 = vsub.f32 %v1686, %v2179
        %2185 = vset.pattern.permute.xlu0 0
        %2186 = vperm.xlu0 %2185, %v2172
        %v2187 = vpop.permute.xlu0 %2186
        %2190 = vset.pattern.permute.xlu0 0
        %2191 = vperm.xlu0 %2190, %v2173
        %v2192 = vpop.permute.xlu0 %2191
        %2195 = vset.pattern.permute.xlu0 0
        %2196 = vperm.xlu0 %2195, %v2174
        %v2197 = vpop.permute.xlu0 %2196
        %2200 = vset.pattern.permute.xlu0 0
        %2201 = vperm.xlu0 %2200, %v2175
        %v2202 = vpop.permute.xlu0 %2201
        %v2204 = vmul.f32 %v2076, %v2187
        %v2205 = vmul.f32 %v2077, %v2187
        %v2206 = vmul.f32 %v2078, %v2187
        %v2207 = vmul.f32 %v2079, %v2187
        %v2208 = vmul.f32 %v2080, %v2192
        %v2209 = vmul.f32 %v2081, %v2192
        %v2210 = vmul.f32 %v2082, %v2192
        %v2211 = vmul.f32 %v2083, %v2192
        %v2212 = vmul.f32 %v2084, %v2197
        %v2213 = vmul.f32 %v2085, %v2197
        %v2214 = vmul.f32 %v2086, %v2197
        %v2215 = vmul.f32 %v2087, %v2197
        %v2216 = vmul.f32 %v2088, %v2202
        %v2217 = vmul.f32 %v2089, %v2202
        %v2218 = vmul.f32 %v2090, %v2202
        %v2219 = vmul.f32 %v2091, %v2202
        %2221 = vset.pattern.permute.xlu0 0
        %2222 = vperm.xlu0 %2221, %v2180
        %v2223 = vpop.permute.xlu0 %2222
        %2226 = vset.pattern.permute.xlu0 0
        %2227 = vperm.xlu0 %2226, %v2181
        %v2228 = vpop.permute.xlu0 %2227
        %2231 = vset.pattern.permute.xlu0 0
        %2232 = vperm.xlu0 %2231, %v2182
        %v2233 = vpop.permute.xlu0 %2232
        %2236 = vset.pattern.permute.xlu0 0
        %2237 = vperm.xlu0 %2236, %v2183
        %v2238 = vpop.permute.xlu0 %2237
        %v2240 = vadd.f32 %v2204, %v2223
        %v2241 = vadd.f32 %v2205, %v2223
        %v2242 = vadd.f32 %v2206, %v2223
        %v2243 = vadd.f32 %v2207, %v2223
        %v2244 = vadd.f32 %v2208, %v2228
        %v2245 = vadd.f32 %v2209, %v2228
        %v2246 = vadd.f32 %v2210, %v2228
        %v2247 = vadd.f32 %v2211, %v2228
        %v2248 = vadd.f32 %v2212, %v2233
        %v2249 = vadd.f32 %v2213, %v2233
        %v2250 = vadd.f32 %v2214, %v2233
        %v2251 = vadd.f32 %v2215, %v2233
        %v2252 = vadd.f32 %v2216, %v2238
        %v2253 = vadd.f32 %v2217, %v2238
        %v2254 = vadd.f32 %v2218, %v2238
        %v2255 = vadd.f32 %v2219, %v2238
        %2256 = vst [vmem:[%s397] sm:$0xff] %v2240
        %2257 = vst [vmem:[%s397 + $0x8] sm:$0xff] %v2241
        %2258 = vst [vmem:[%s397 + $0x10] sm:$0xff] %v2242
        %2259 = vst [vmem:[%s397 + $0x18] sm:$0xff] %v2243
        %2260 = vst [vmem:[%s397 + $0x20] sm:$0xff] %v2244
        %2261 = vst [vmem:[%s397 + $0x28] sm:$0xff] %v2245
        %2262 = vst [vmem:[%s397 + $0x30] sm:$0xff] %v2246
        %2263 = vst [vmem:[%s397 + $0x38] sm:$0xff] %v2247
        %2264 = vst [vmem:[%s397 + $0x40] sm:$0xff] %v2248
        %2265 = vst [vmem:[%s397 + $0x48] sm:$0xff] %v2249
        %2266 = vst [vmem:[%s397 + $0x50] sm:$0xff] %v2250
        %2267 = vst [vmem:[%s397 + $0x58] sm:$0xff] %v2251
        %2268 = vst [vmem:[%s397 + $0x60] sm:$0xff] %v2252
        %2269 = vst [vmem:[%s397 + $0x68] sm:$0xff] %v2253
        %2270 = vst [vmem:[%s397 + $0x70] sm:$0xff] %v2254
        %2271 = vst [vmem:[%s397 + $0x78] sm:$0xff] %v2255
        %s2272 = sand.u32 %s262, 1
        %s2273 = scalar_lea.sflag [#allocation3], %s2272
        %s2274 = sand.u32 %s262, 1
        %s2275 = smul.addr %s2274, 128
        %s2276 = scalar_lea.vmem [#allocation2], %s2275
        // Predicated region
        $region61: #{tpu_custom_call.1} parent=59 // pred_check
          %p2277 = pneg %p272
        $region62: #{tpu_custom_call.1} parent=59 // pred_check_branch
          %2279 = sbr.rel (%p2277) target = $region64
        $region63: #{tpu_custom_call.1} parent=59 // pred_region
          %s2280 = smul.u32 4, %s24
          %s2282 = ssub.s32 2048, 2048
          %2283 = vsyncadd %s2273, %s2282
          %s2284 = smul.addr %s2280, 4
          %s2285 = smul.addr %s2284, 128
          %s2286 = scalar_lea.hbm %s10, %s2285
          %s2287 = sshll.u32 %s2276, 4
          %s2288 = int_to_ptr.vmem [resolvable:$true] %s2287
          %2293 = dma.vmem_to_hbm [thread:$0]  %s2288, 2048, %s2286, %s2273, 512, 512, 32
        $region64: #{tpu_custom_call.1} parent=59 // pred_fallthru
          _
      $region60: #{tpu_custom_call.1} parent=5 // pred_fallthru
        _
      %p2294 = scmp.le.s32.totalorder 2, %s19
      // Predicated region
      $region65: #{tpu_custom_call.1} parent=5 // pred_check
        %p2295 = pneg %p2294
      $region66: #{tpu_custom_call.1} parent=5 // pred_check_branch
        %2297 = sbr.rel (%p2295) target = $region68
      $region67: #{tpu_custom_call.1} parent=5 // pred_region
        %s2298 = ssub.s32 %s19, 2
        // Predicated region
        $region69: #{tpu_custom_call.1} parent=67 // pred_check
          %p2299 = pneg %p278
        $region70: #{tpu_custom_call.1} parent=67 // pred_check_branch
          %2301 = sbr.rel (%p2299) target = $region72
        $region71: #{tpu_custom_call.1} parent=67 // pred_region
          %s2302 = sand.u32 %s263, 1
          %s2303 = scalar_lea.sflag [#allocation3], %s2302
          %s2304 = sand.u32 %s263, 1
          %s2305 = smul.addr %s2304, 128
          %s2306 = scalar_lea.vmem [#allocation2], %s2305
          %2307 = dma.done %s2303, 2048
        $region72: #{tpu_custom_call.1} parent=67 // pred_fallthru
          _
      $region68: #{tpu_custom_call.1} parent=5 // pred_fallthru
        _
    $region6: #{tpu_custom_call.1} parent=1 // loop_footer
      %s23 = sadd.s32 1, %s19
    $region7: #{tpu_custom_call.1} parent=1 // loop_footer_branch
      %18 = sbr.rel target = $region3
    $region8: #{tpu_custom_call.1} parent=1 // loop_exit
      _
    %2308 = vsyncpa [#allocation3], 1
    %s2309 = scalar_lea.sflag [#allocation3], 1
    %2310 = vsyncpa %s2309, 1

</llo_original>
